<compile_context>
chip_gen: v7x
topology: tpu7x:2x2x1
jax: 0.10.0
libtpu: 0.0.40
codegen_flags: <defaults>
</compile_context>

<pallas_src>
import numpy as np
import jax
import jax.numpy as jnp
from jax import lax
from jax.experimental import pallas as pl
from jax.experimental.pallas import tpu as pltpu

REG_MAX = 16
EPS = 1e-7
PIOU_LAMBDA = 1.3
LANES = 128


def _bbox_loss_kernel(pd_ref, pb_ref, tb_ref, anc_ref, w_ref,
                      iou_out_ref, dfl_out_ref):
    i = pl.program_id(1)

    @pl.when(i == 0)
    def _init():
        iou_out_ref[...] = jnp.zeros_like(iou_out_ref)
        dfl_out_ref[...] = jnp.zeros_like(dfl_out_ref)

    # weight = target_scores.sum(-1) * fg_mask  (precomputed host-side).
    # NOTE: weight doubles as the validity mask (weight > 0).  A foreground
    # anchor with an exactly-zero score sum contributes 0 to both losses in the
    # PyTorch reference as well, so this is numerically identical -- but if the
    # weighting scheme ever changes, pass an explicit mask instead.
    weight = w_ref[0]                                   # (R, 128) dense vregs
    valid = weight > 0.0

    pb = pb_ref[...]                                    # (4, R, 128) pred xyxy
    tb = tb_ref[...]                                    # (4, R, 128) target xyxy
    b1_x1, b1_y1, b1_x2, b1_y2 = pb[0], pb[1], pb[2], pb[3]
    b2_x1, b2_y1, b2_x2, b2_y2 = tb[0], tb[1], tb[2], tb[3]

    # ---------------- PIoU2 (xywh=False) ----------------
    w1 = b1_x2 - b1_x1
    h1 = b1_y2 - b1_y1 + EPS
    w2 = b2_x2 - b2_x1
    h2 = b2_y2 - b2_y1 + EPS

    inter = (jnp.maximum(jnp.minimum(b1_x2, b2_x2) - jnp.maximum(b1_x1, b2_x1), 0.0) *
             jnp.maximum(jnp.minimum(b1_y2, b2_y2) - jnp.maximum(b1_y1, b2_y1), 0.0))
    union = w1 * h1 + w2 * h2 - inter + EPS
    iou = inter / union                    # exact divide: IoU parity with torch

    # cw / ch are (max - min), hence nonnegative: no abs needed.
    cw = jnp.maximum(b1_x2, b2_x2) - jnp.minimum(b1_x1, b2_x1)
    ch = jnp.maximum(b1_y2, b2_y2) - jnp.minimum(b1_y1, b2_y1)
    dw1 = jnp.abs(jnp.minimum(b1_x2, b1_x1) - jnp.minimum(b2_x2, b2_x1))
    dw2 = jnp.abs(jnp.maximum(b1_x2, b1_x1) - jnp.maximum(b2_x2, b2_x1))
    dh1 = jnp.abs(jnp.minimum(b1_y2, b1_y1) - jnp.minimum(b2_y2, b2_y1))
    dh2 = jnp.abs(jnp.maximum(b1_y2, b1_y1) - jnp.maximum(b2_y2, b2_y1))
    P = ((dw1 + dw2) * pl.reciprocal(cw, approx=True) +
         (dh1 + dh2) * pl.reciprocal(ch, approx=True)) * 0.25
    piou_v1 = 1.0 - iou - jnp.exp(-(P * P)) + 1.0
    x = jnp.exp(-P) * PIOU_LAMBDA
    piou2 = 3.0 * x * jnp.exp(-(x * x)) * piou_v1

    # Padded / masked lanes deliberately produce Inf/NaN above; the where masks.
    loss_iou_tile = jnp.where(valid, (1.0 - piou2) * weight, 0.0)   # (R, 128)

    # ---------------- DFL ----------------
    anc = anc_ref[...]                                  # (2, R, 128)
    anc_x, anc_y = anc[0], anc[1]
    # target_ltrb = bbox2dist(anchor, target_bbox, reg_max - 1): order (l,t,r,b)
    tgt = (anc_x - b2_x1, anc_y - b2_y1, b2_x2 - anc_x, b2_y2 - anc_y)

    pd = pd_ref[...].astype(jnp.float32)                # (4*REG_MAX, R, 128)
    # Hoisted bin-index iota shared by all 4 sides (hat-function weights).
    kf = lax.broadcasted_iota(jnp.int32,
                              (REG_MAX,) + weight.shape, 0).astype(jnp.float32)

    dfl_sum = jnp.zeros_like(weight)
    for s in range(4):
        t = jnp.clip(tgt[s], 0.0, (REG_MAX - 1) - 0.01)            # (R, 128)
        logits = pd[s * REG_MAX:(s + 1) * REG_MAX]                 # (16, R, 128)
        m = jnp.max(logits, axis=0)                                # (R, 128)
        lse = jnp.log(jnp.sum(jnp.exp(logits - m[None]), axis=0)) + m
        # Bilinear (tl, tl+1) weights as a hat function; they sum to 1, so
        # CE(tl)*wl + CE(tr)*wr == lse - sum(soft * logits).
        soft = jnp.maximum(0.0, 1.0 - jnp.abs(kf - t[None]))       # (16, R, 128)
        dfl_sum = dfl_sum + (lse - jnp.sum(soft * logits, axis=0))

    loss_dfl_tile = jnp.where(valid, dfl_sum * 0.25 * weight, 0.0)  # (R, 128)

    # Output BlockSpec returns the same block for every i -> grid-resident
    # accumulators; written back to HBM once per core.
    iou_out_ref[...] += loss_iou_tile[None]
    dfl_out_ref[...] += loss_dfl_tile[None]


def bbox_loss_pallas(pred_dist, pred_bboxes, anchor_points, target_bboxes,
                     target_scores, target_scores_sum, fg_mask,
                     row_tile=16, pred_dist_bf16=False):
    """BboxLoss forward.  row_tile rows of 128 anchors per grid step per core.

    pred_dist_bf16=True streams pred_dist (the dominant HBM tensor) as bf16 --
    recommended on v5e/v6e where the kernel is HBM-bound; keep False for exact
    f32 parity.  row_tile must stay a multiple of 16 when bf16 is enabled.
    """
    B, N, _ = pred_bboxes.shape
    M = B * N
    n_cores = 2                        # 2-way megacore split (v7x); harmless on v5e/v6e
    chunk_rows = n_cores * row_tile    # sublane rows (of 128 lanes) per full grid sweep
    rows = -(-M // LANES)
    G = -(-rows // chunk_rows) * chunk_rows
    n_inner = G // chunk_rows
    M_pad = G * LANES

    pd_dtype = jnp.bfloat16 if pred_dist_bf16 else jnp.float32

    # TODO(synk): the feature-major (feat, G, 128) layout is produced here by an
    # XLA transpose+pad of the largest tensor (pred_dist); emitting this layout
    # directly from the detection head would remove that extra HBM round trip.
    def prep(x, feat, dtype=jnp.float32):
        x = x.reshape(M, feat).astype(dtype).T          # (feat, M)
        x = jnp.pad(x, ((0, 0), (0, M_pad - M)))
        return x.reshape(feat, G, LANES)

    pd = prep(pred_dist, 4 * REG_MAX, pd_dtype)
    pb = prep(pred_bboxes, 4)
    tb = prep(target_bboxes, 4)
    anc = prep(jnp.broadcast_to(anchor_points[None], (B, N, 2)), 2)
    w = (target_scores.astype(jnp.float32).sum(-1)
         * fg_mask.astype(jnp.float32)).reshape(1, M)
    w = jnp.pad(w, ((0, 0), (0, M_pad - M))).reshape(1, G, LANES)

    in_idx = lambda c, i: (0, c * n_inner + i, 0)
    out_idx = lambda c, i: (c, 0, 0)

    iou_out, dfl_out = pl.pallas_call(
        _bbox_loss_kernel,
        out_shape=(jax.ShapeDtypeStruct((n_cores, row_tile, LANES), jnp.float32),
                   jax.ShapeDtypeStruct((n_cores, row_tile, LANES), jnp.float32)),
        grid=(n_cores, n_inner),
        in_specs=[
            pl.BlockSpec((4 * REG_MAX, row_tile, LANES), in_idx),
            pl.BlockSpec((4, row_tile, LANES), in_idx),
            pl.BlockSpec((4, row_tile, LANES), in_idx),
            pl.BlockSpec((2, row_tile, LANES), in_idx),
            pl.BlockSpec((1, row_tile, LANES), in_idx),
        ],
        out_specs=(pl.BlockSpec((1, row_tile, LANES), out_idx),
                   pl.BlockSpec((1, row_tile, LANES), out_idx)),
        compiler_params=pltpu.CompilerParams(
            dimension_semantics=("parallel", "arbitrary")),
    )(pd, pb, tb, anc, w)

    tss = jnp.asarray(target_scores_sum, jnp.float32)
    return jnp.sum(iou_out) / tss, jnp.sum(dfl_out) / tss


def _reference_numpy(pred_dist, pred_bboxes, anchor_points, target_bboxes,
                     target_scores, target_scores_sum, fg_mask):
    eps, lam, R = 1e-7, 1.3, REG_MAX
    fg = fg_mask.astype(bool)
    weight = target_scores.sum(-1)[fg][:, None]
    pb, tb = pred_bboxes[fg], target_bboxes[fg]
    b1_x1, b1_y1, b1_x2, b1_y2 = [pb[:, i:i + 1] for i in range(4)]
    b2_x1, b2_y1, b2_x2, b2_y2 = [tb[:, i:i + 1] for i in range(4)]
    w1, h1 = b1_x2 - b1_x1, b1_y2 - b1_y1 + eps
    w2, h2 = b2_x2 - b2_x1, b2_y2 - b2_y1 + eps
    inter = (np.clip(np.minimum(b1_x2, b2_x2) - np.maximum(b1_x1, b2_x1), 0, None) *
             np.clip(np.minimum(b1_y2, b2_y2) - np.maximum(b1_y1, b2_y1), 0, None))
    union = w1 * h1 + w2 * h2 - inter + eps
    iou = inter / union
    cw = np.maximum(b1_x2, b2_x2) - np.minimum(b1_x1, b2_x1)
    ch = np.maximum(b1_y2, b2_y2) - np.minimum(b1_y1, b2_y1)
    dw1 = np.abs(np.minimum(b1_x2, b1_x1) - np.minimum(b2_x2, b2_x1))
    dw2 = np.abs(np.maximum(b1_x2, b1_x1) - np.maximum(b2_x2, b2_x1))
    dh1 = np.abs(np.minimum(b1_y2, b1_y1) - np.minimum(b2_y2, b2_y1))
    dh2 = np.abs(np.maximum(b1_y2, b1_y1) - np.maximum(b2_y2, b2_y1))
    P = ((dw1 + dw2) / np.abs(cw) + (dh1 + dh2) / np.abs(ch)) / 4
    v1 = 1 - iou - np.exp(-P ** 2) + 1
    x = np.exp(-P) * lam
    piou2 = 3 * x * np.exp(-x ** 2) * v1
    loss_iou = ((1.0 - piou2) * weight).sum() / target_scores_sum

    anc = np.broadcast_to(anchor_points[None], target_bboxes.shape[:2] + (2,))
    t = np.concatenate([anc - target_bboxes[..., :2], target_bboxes[..., 2:] - anc], -1)
    t = np.clip(t, 0, R - 1 - 0.01)[fg]
    tl = np.floor(t).astype(np.int64)
    tr = tl + 1
    wl = tr - t
    wr = 1 - wl
    logits = pred_dist[fg].reshape(-1, R)
    m = logits.max(-1, keepdims=True)
    logp = logits - (np.log(np.exp(logits - m).sum(-1, keepdims=True)) + m)
    ce_l = -np.take_along_axis(logp, tl.reshape(-1, 1), 1).reshape(tl.shape)
    ce_r = -np.take_along_axis(logp, tr.reshape(-1, 1), 1).reshape(tl.shape)
    dfl = ((ce_l * wl + ce_r * wr).mean(-1, keepdims=True) * weight).sum() / target_scores_sum
    return float(loss_iou), float(dfl)


if __name__ == "__main__":
    key = jax.random.PRNGKey(0)
    B, N, C = 2, 64, 8
    ks = jax.random.split(key, 8)

    anchor_points = jax.random.uniform(ks[0], (N, 2), jnp.float32, 2.0, 18.0)
    tw = jax.random.uniform(ks[1], (B, N, 2), jnp.float32, 1.0, 8.0)
    tc = anchor_points[None] + jax.random.uniform(ks[2], (B, N, 2), jnp.float32, -2.0, 2.0)
    target_bboxes = jnp.concatenate([tc - tw / 2, tc + tw / 2], axis=-1)
    pw = jax.random.uniform(ks[3], (B, N, 2), jnp.float32, 1.0, 8.0)
    pc = anchor_points[None] + jax.random.uniform(ks[4], (B, N, 2), jnp.float32, -2.0, 2.0)
    pred_bboxes = jnp.concatenate([pc - pw / 2, pc + pw / 2], axis=-1)
    pred_dist = jax.random.normal(ks[5], (B, N, 4 * REG_MAX), jnp.float32)
    target_scores = jax.random.uniform(ks[6], (B, N, C), jnp.float32)
    fg_mask = jax.random.bernoulli(ks[7], 0.5, (B, N)).at[0, 0].set(True)
    target_scores_sum = jnp.maximum(target_scores.sum(), 1.0)

    loss_iou, loss_dfl = bbox_loss_pallas(pred_dist, pred_bboxes, anchor_points,
                                          target_bboxes, target_scores,
                                          target_scores_sum, fg_mask)
    jax.block_until_ready((loss_iou, loss_dfl))

    ref_iou, ref_dfl = _reference_numpy(
        np.asarray(pred_dist), np.asarray(pred_bboxes), np.asarray(anchor_points),
        np.asarray(target_bboxes), np.asarray(target_scores),
        float(target_scores_sum), np.asarray(fg_mask))

    assert np.allclose(float(loss_iou), ref_iou, rtol=2e-3, atol=2e-3), (float(loss_iou), ref_iou)
    assert np.allclose(float(loss_dfl), ref_dfl, rtol=2e-3, atol=2e-3), (float(loss_dfl), ref_dfl)
    print("KERNEL_OK")
</pallas_src>

<mosaic_0001>
module attributes {stable_mosaic.version = 11 : i64} {
  func.func @_bbox_loss_kernel(%arg0: i32, %arg1: i32, %arg2: memref<64x16x128xf32, #tpu.memory_space<vmem>>, %arg3: memref<4x16x128xf32, #tpu.memory_space<vmem>>, %arg4: memref<4x16x128xf32, #tpu.memory_space<vmem>>, %arg5: memref<2x16x128xf32, #tpu.memory_space<vmem>>, %arg6: memref<1x16x128xf32, #tpu.memory_space<vmem>>, %arg7: memref<1x16x128xf32, #tpu.memory_space<vmem>>, %arg8: memref<1x16x128xf32, #tpu.memory_space<vmem>>) attributes {dimension_semantics = [#tpu.dimension_semantics<parallel>, #tpu.dimension_semantics<arbitrary>], iteration_bounds = array<i64: 2, 1>, scalar_prefetch = 0 : i64, scratch_operands = 0 : i64, tpu.core_type = #tpu.core_type<tc>, window_params = [{transform_indices = @transform_0, window_bounds = array<i64: 64, 16, 128>}, {transform_indices = @transform_1, window_bounds = array<i64: 4, 16, 128>}, {transform_indices = @transform_2, window_bounds = array<i64: 4, 16, 128>}, {transform_indices = @transform_3, window_bounds = array<i64: 2, 16, 128>}, {transform_indices = @transform_4, window_bounds = array<i64: 1, 16, 128>}, {transform_indices = @transform_5, window_bounds = array<i64: 1, 16, 128>}, {transform_indices = @transform_6, window_bounds = array<i64: 1, 16, 128>}]} {
    %c0_i32 = arith.constant 0 : i32
    %0 = arith.cmpi eq, %arg1, %c0_i32 : i32
    %1 = arith.extui %0 : i1 to i32
    %c0_i32_0 = arith.constant 0 : i32
    %2 = arith.cmpi ne, %1, %c0_i32_0 : i32
    scf.if %2 {
      %cst_73 = arith.constant 0.000000e+00 : f32
      %235 = vector.broadcast %cst_73 : f32 to vector<1x16x128xf32>
      %c0_74 = arith.constant 0 : index
      %c0_75 = arith.constant 0 : index
      %c0_76 = arith.constant 0 : index
      %236 = vector.load %arg7[%c0_74, %c0_75, %c0_76] : memref<1x16x128xf32, #tpu.memory_space<vmem>>, vector<1x16x128xf32>
      tpu.vector_store %arg7[%c0_74, %c0_75, %c0_76], %235 {strides = array<i32>} : memref<1x16x128xf32, #tpu.memory_space<vmem>>, vector<1x16x128xf32>,
      %cst_77 = arith.constant 0.000000e+00 : f32
      %237 = vector.broadcast %cst_77 : f32 to vector<1x16x128xf32>
      %c0_78 = arith.constant 0 : index
      %c0_79 = arith.constant 0 : index
      %c0_80 = arith.constant 0 : index
      %238 = vector.load %arg8[%c0_78, %c0_79, %c0_80] : memref<1x16x128xf32, #tpu.memory_space<vmem>>, vector<1x16x128xf32>
      tpu.vector_store %arg8[%c0_78, %c0_79, %c0_80], %237 {strides = array<i32>} : memref<1x16x128xf32, #tpu.memory_space<vmem>>, vector<1x16x128xf32>,
    } else {
    }
    %c0 = arith.constant 0 : index
    %c0_1 = arith.constant 0 : index
    %c0_2 = arith.constant 0 : index
    %3 = vector.load %arg6[%c0, %c0_1, %c0_2] : memref<1x16x128xf32, #tpu.memory_space<vmem>>, vector<1x16x128xf32>
    %4 = vector.shape_cast %3 : vector<1x16x128xf32> to vector<16x128xf32>
    %cst = arith.constant 0.000000e+00 : f32
    %5 = vector.broadcast %cst : f32 to vector<16x128xf32>
    %6 = arith.cmpf ogt, %4, %5 : vector<16x128xf32>
    %c0_3 = arith.constant 0 : index
    %c0_4 = arith.constant 0 : index
    %c0_5 = arith.constant 0 : index
    %7 = vector.load %arg3[%c0_3, %c0_4, %c0_5] : memref<4x16x128xf32, #tpu.memory_space<vmem>>, vector<4x16x128xf32>
    %c0_6 = arith.constant 0 : index
    %c0_7 = arith.constant 0 : index
    %c0_8 = arith.constant 0 : index
    %8 = vector.load %arg4[%c0_6, %c0_7, %c0_8] : memref<4x16x128xf32, #tpu.memory_space<vmem>>, vector<4x16x128xf32>
    %9 = vector.extract_strided_slice %7 {offsets = [0, 0, 0], sizes = [1, 16, 128], strides = [1, 1, 1]} : vector<4x16x128xf32> to vector<1x16x128xf32>
    %10 = vector.shape_cast %9 : vector<1x16x128xf32> to vector<16x128xf32>
    %11 = vector.extract_strided_slice %7 {offsets = [1, 0, 0], sizes = [1, 16, 128], strides = [1, 1, 1]} : vector<4x16x128xf32> to vector<1x16x128xf32>
    %12 = vector.shape_cast %11 : vector<1x16x128xf32> to vector<16x128xf32>
    %13 = vector.extract_strided_slice %7 {offsets = [2, 0, 0], sizes = [1, 16, 128], strides = [1, 1, 1]} : vector<4x16x128xf32> to vector<1x16x128xf32>
    %14 = vector.shape_cast %13 : vector<1x16x128xf32> to vector<16x128xf32>
    %15 = vector.extract_strided_slice %7 {offsets = [3, 0, 0], sizes = [1, 16, 128], strides = [1, 1, 1]} : vector<4x16x128xf32> to vector<1x16x128xf32>
    %16 = vector.shape_cast %15 : vector<1x16x128xf32> to vector<16x128xf32>
    %17 = vector.extract_strided_slice %8 {offsets = [0, 0, 0], sizes = [1, 16, 128], strides = [1, 1, 1]} : vector<4x16x128xf32> to vector<1x16x128xf32>
    %18 = vector.shape_cast %17 : vector<1x16x128xf32> to vector<16x128xf32>
    %19 = vector.extract_strided_slice %8 {offsets = [1, 0, 0], sizes = [1, 16, 128], strides = [1, 1, 1]} : vector<4x16x128xf32> to vector<1x16x128xf32>
    %20 = vector.shape_cast %19 : vector<1x16x128xf32> to vector<16x128xf32>
    %21 = vector.extract_strided_slice %8 {offsets = [2, 0, 0], sizes = [1, 16, 128], strides = [1, 1, 1]} : vector<4x16x128xf32> to vector<1x16x128xf32>
    %22 = vector.shape_cast %21 : vector<1x16x128xf32> to vector<16x128xf32>
    %23 = vector.extract_strided_slice %8 {offsets = [3, 0, 0], sizes = [1, 16, 128], strides = [1, 1, 1]} : vector<4x16x128xf32> to vector<1x16x128xf32>
    %24 = vector.shape_cast %23 : vector<1x16x128xf32> to vector<16x128xf32>
    %25 = arith.subf %14, %10 : vector<16x128xf32>
    %26 = arith.subf %16, %12 : vector<16x128xf32>
    %cst_9 = arith.constant 1.000000e-07 : f32
    %27 = vector.broadcast %cst_9 : f32 to vector<16x128xf32>
    %28 = arith.addf %26, %27 : vector<16x128xf32>
    %29 = arith.subf %22, %18 : vector<16x128xf32>
    %30 = arith.subf %24, %20 : vector<16x128xf32>
    %cst_10 = arith.constant 1.000000e-07 : f32
    %31 = vector.broadcast %cst_10 : f32 to vector<16x128xf32>
    %32 = arith.addf %30, %31 : vector<16x128xf32>
    %33 = arith.minimumf %14, %22 : vector<16x128xf32>
    %34 = arith.maximumf %10, %18 : vector<16x128xf32>
    %35 = arith.subf %33, %34 : vector<16x128xf32>
    %cst_11 = arith.constant 0.000000e+00 : f32
    %36 = vector.broadcast %cst_11 : f32 to vector<16x128xf32>
    %37 = arith.maximumf %35, %36 : vector<16x128xf32>
    %38 = arith.minimumf %16, %24 : vector<16x128xf32>
    %39 = arith.maximumf %12, %20 : vector<16x128xf32>
    %40 = arith.subf %38, %39 : vector<16x128xf32>
    %cst_12 = arith.constant 0.000000e+00 : f32
    %41 = vector.broadcast %cst_12 : f32 to vector<16x128xf32>
    %42 = arith.maximumf %40, %41 : vector<16x128xf32>
    %43 = arith.mulf %37, %42 : vector<16x128xf32>
    %44 = arith.mulf %25, %28 : vector<16x128xf32>
    %45 = arith.mulf %29, %32 : vector<16x128xf32>
    %46 = arith.addf %44, %45 : vector<16x128xf32>
    %47 = arith.subf %46, %43 : vector<16x128xf32>
    %cst_13 = arith.constant 1.000000e-07 : f32
    %48 = vector.broadcast %cst_13 : f32 to vector<16x128xf32>
    %49 = arith.addf %47, %48 : vector<16x128xf32>
    %50 = arith.divf %43, %49 : vector<16x128xf32>
    %51 = arith.maximumf %14, %22 : vector<16x128xf32>
    %52 = arith.minimumf %10, %18 : vector<16x128xf32>
    %53 = arith.subf %51, %52 : vector<16x128xf32>
    %54 = arith.maximumf %16, %24 : vector<16x128xf32>
    %55 = arith.minimumf %12, %20 : vector<16x128xf32>
    %56 = arith.subf %54, %55 : vector<16x128xf32>
    %57 = arith.minimumf %14, %10 : vector<16x128xf32>
    %58 = arith.minimumf %22, %18 : vector<16x128xf32>
    %59 = arith.subf %57, %58 : vector<16x128xf32>
    %60 = math.absf %59 : vector<16x128xf32>
    %61 = arith.maximumf %14, %10 : vector<16x128xf32>
    %62 = arith.maximumf %22, %18 : vector<16x128xf32>
    %63 = arith.subf %61, %62 : vector<16x128xf32>
    %64 = math.absf %63 : vector<16x128xf32>
    %65 = arith.minimumf %16, %12 : vector<16x128xf32>
    %66 = arith.minimumf %24, %20 : vector<16x128xf32>
    %67 = arith.subf %65, %66 : vector<16x128xf32>
    %68 = math.absf %67 : vector<16x128xf32>
    %69 = arith.maximumf %16, %12 : vector<16x128xf32>
    %70 = arith.maximumf %24, %20 : vector<16x128xf32>
    %71 = arith.subf %69, %70 : vector<16x128xf32>
    %72 = math.absf %71 : vector<16x128xf32>
    %73 = arith.addf %60, %64 : vector<16x128xf32>
    %74 = tpu.reciprocal %53 {approx = true} : vector<16x128xf32> -> vector<16x128xf32>
    %75 = arith.mulf %73, %74 : vector<16x128xf32>
    %76 = arith.addf %68, %72 : vector<16x128xf32>
    %77 = tpu.reciprocal %56 {approx = true} : vector<16x128xf32> -> vector<16x128xf32>
    %78 = arith.mulf %76, %77 : vector<16x128xf32>
    %79 = arith.addf %75, %78 : vector<16x128xf32>
    %cst_14 = arith.constant 2.500000e-01 : f32
    %80 = vector.broadcast %cst_14 : f32 to vector<16x128xf32>
    %81 = arith.mulf %79, %80 : vector<16x128xf32>
    %cst_15 = arith.constant 1.000000e+00 : f32
    %82 = vector.broadcast %cst_15 : f32 to vector<16x128xf32>
    %83 = arith.subf %82, %50 : vector<16x128xf32>
    %84 = arith.mulf %81, %81 : vector<16x128xf32>
    %cst_16 = arith.constant 0.000000e+00 : f32
    %85 = vector.broadcast %cst_16 : f32 to vector<16x128xf32>
    %86 = arith.subf %85, %84 : vector<16x128xf32>
    %87 = math.exp %86 : vector<16x128xf32>
    %88 = arith.subf %83, %87 : vector<16x128xf32>
    %cst_17 = arith.constant 1.000000e+00 : f32
    %89 = vector.broadcast %cst_17 : f32 to vector<16x128xf32>
    %90 = arith.addf %88, %89 : vector<16x128xf32>
    %cst_18 = arith.constant 0.000000e+00 : f32
    %91 = vector.broadcast %cst_18 : f32 to vector<16x128xf32>
    %92 = arith.subf %91, %81 : vector<16x128xf32>
    %93 = math.exp %92 : vector<16x128xf32>
    %cst_19 = arith.constant 1.300000e+00 : f32
    %94 = vector.broadcast %cst_19 : f32 to vector<16x128xf32>
    %95 = arith.mulf %93, %94 : vector<16x128xf32>
    %cst_20 = arith.constant 3.000000e+00 : f32
    %96 = vector.broadcast %cst_20 : f32 to vector<16x128xf32>
    %97 = arith.mulf %96, %95 : vector<16x128xf32>
    %98 = arith.mulf %95, %95 : vector<16x128xf32>
    %cst_21 = arith.constant 0.000000e+00 : f32
    %99 = vector.broadcast %cst_21 : f32 to vector<16x128xf32>
    %100 = arith.subf %99, %98 : vector<16x128xf32>
    %101 = math.exp %100 : vector<16x128xf32>
    %102 = arith.mulf %97, %101 : vector<16x128xf32>
    %103 = arith.mulf %102, %90 : vector<16x128xf32>
    %cst_22 = arith.constant 1.000000e+00 : f32
    %104 = vector.broadcast %cst_22 : f32 to vector<16x128xf32>
    %105 = arith.subf %104, %103 : vector<16x128xf32>
    %106 = arith.mulf %105, %4 : vector<16x128xf32>
    %cst_23 = arith.constant 0.000000e+00 : f32
    %107 = vector.broadcast %cst_23 : f32 to vector<16x128xf32>
    %108 = arith.select %6, %106, %107 : vector<16x128xi1>, vector<16x128xf32>
    %c0_24 = arith.constant 0 : index
    %c0_25 = arith.constant 0 : index
    %c0_26 = arith.constant 0 : index
    %109 = vector.load %arg5[%c0_24, %c0_25, %c0_26] : memref<2x16x128xf32, #tpu.memory_space<vmem>>, vector<2x16x128xf32>
    %110 = vector.extract_strided_slice %109 {offsets = [0, 0, 0], sizes = [1, 16, 128], strides = [1, 1, 1]} : vector<2x16x128xf32> to vector<1x16x128xf32>
    %111 = vector.shape_cast %110 : vector<1x16x128xf32> to vector<16x128xf32>
    %112 = vector.extract_strided_slice %109 {offsets = [1, 0, 0], sizes = [1, 16, 128], strides = [1, 1, 1]} : vector<2x16x128xf32> to vector<1x16x128xf32>
    %113 = vector.shape_cast %112 : vector<1x16x128xf32> to vector<16x128xf32>
    %114 = arith.subf %111, %18 : vector<16x128xf32>
    %115 = arith.subf %113, %20 : vector<16x128xf32>
    %116 = arith.subf %22, %111 : vector<16x128xf32>
    %117 = arith.subf %24, %113 : vector<16x128xf32>
    %c0_27 = arith.constant 0 : index
    %c0_28 = arith.constant 0 : index
    %c0_29 = arith.constant 0 : index
    %118 = vector.load %arg2[%c0_27, %c0_28, %c0_29] : memref<64x16x128xf32, #tpu.memory_space<vmem>>, vector<64x16x128xf32>
    %119 = tpu.iota {dimensions = array<i32: 0>} : vector<16x16x128xi32>
    %120 = arith.sitofp %119 : vector<16x16x128xi32> to vector<16x16x128xf32>
    %cst_30 = arith.constant 0.000000e+00 : f32
    %121 = vector.broadcast %cst_30 : f32 to vector<16x128xf32>
    %cst_31 = arith.constant 0.000000e+00 : f32
    %cst_32 = arith.constant 1.499000e+01 : f32
    %122 = vector.broadcast %cst_31 : f32 to vector<16x128xf32>
    %123 = arith.maximumf %122, %114 : vector<16x128xf32>
    %124 = vector.broadcast %cst_32 : f32 to vector<16x128xf32>
    %125 = arith.minimumf %124, %123 : vector<16x128xf32>
    %126 = vector.extract_strided_slice %118 {offsets = [0, 0, 0], sizes = [16, 16, 128], strides = [1, 1, 1]} : vector<64x16x128xf32> to vector<16x16x128xf32>
    %cst_33 = arith.constant dense<0xFF800000> : vector<16x128xf32>
    %127 = vector.multi_reduction <maximumf>, %126, %cst_33 [0] : vector<16x16x128xf32> to vector<16x128xf32>
    %128 = vector.shape_cast %127 : vector<16x128xf32> to vector<1x16x128xf32>
    %129 = vector.broadcast %128 : vector<1x16x128xf32> to vector<16x16x128xf32>
    %130 = arith.subf %126, %129 : vector<16x16x128xf32>
    %131 = math.exp %130 : vector<16x16x128xf32>
    %cst_34 = arith.constant dense<0.000000e+00> : vector<16x128xf32>
    %132 = vector.multi_reduction <add>, %131, %cst_34 [0] : vector<16x16x128xf32> to vector<16x128xf32>
    %133 = math.log %132 : vector<16x128xf32>
    %134 = arith.addf %133, %127 : vector<16x128xf32>
    %135 = vector.shape_cast %125 : vector<16x128xf32> to vector<1x16x128xf32>
    %136 = vector.broadcast %135 : vector<1x16x128xf32> to vector<16x16x128xf32>
    %137 = arith.subf %120, %136 : vector<16x16x128xf32>
    %138 = math.absf %137 : vector<16x16x128xf32>
    %cst_35 = arith.constant 1.000000e+00 : f32
    %139 = vector.broadcast %cst_35 : f32 to vector<16x16x128xf32>
    %140 = arith.subf %139, %138 : vector<16x16x128xf32>
    %cst_36 = arith.constant 0.000000e+00 : f32
    %141 = vector.broadcast %cst_36 : f32 to vector<16x16x128xf32>
    %142 = arith.maximumf %141, %140 : vector<16x16x128xf32>
    %143 = arith.mulf %142, %126 : vector<16x16x128xf32>
    %cst_37 = arith.constant dense<0.000000e+00> : vector<16x128xf32>
    %144 = vector.multi_reduction <add>, %143, %cst_37 [0] : vector<16x16x128xf32> to vector<16x128xf32>
    %145 = arith.subf %134, %144 : vector<16x128xf32>
    %146 = arith.addf %121, %145 : vector<16x128xf32>
    %cst_38 = arith.constant 0.000000e+00 : f32
    %cst_39 = arith.constant 1.499000e+01 : f32
    %147 = vector.broadcast %cst_38 : f32 to vector<16x128xf32>
    %148 = arith.maximumf %147, %115 : vector<16x128xf32>
    %149 = vector.broadcast %cst_39 : f32 to vector<16x128xf32>
    %150 = arith.minimumf %149, %148 : vector<16x128xf32>
    %151 = vector.extract_strided_slice %118 {offsets = [16, 0, 0], sizes = [16, 16, 128], strides = [1, 1, 1]} : vector<64x16x128xf32> to vector<16x16x128xf32>
    %cst_40 = arith.constant dense<0xFF800000> : vector<16x128xf32>
    %152 = vector.multi_reduction <maximumf>, %151, %cst_40 [0] : vector<16x16x128xf32> to vector<16x128xf32>
    %153 = vector.shape_cast %152 : vector<16x128xf32> to vector<1x16x128xf32>
    %154 = vector.broadcast %153 : vector<1x16x128xf32> to vector<16x16x128xf32>
    %155 = arith.subf %151, %154 : vector<16x16x128xf32>
    %156 = math.exp %155 : vector<16x16x128xf32>
    %cst_41 = arith.constant dense<0.000000e+00> : vector<16x128xf32>
    %157 = vector.multi_reduction <add>, %156, %cst_41 [0] : vector<16x16x128xf32> to vector<16x128xf32>
    %158 = math.log %157 : vector<16x128xf32>
    %159 = arith.addf %158, %152 : vector<16x128xf32>
    %160 = vector.shape_cast %150 : vector<16x128xf32> to vector<1x16x128xf32>
    %161 = vector.broadcast %160 : vector<1x16x128xf32> to vector<16x16x128xf32>
    %162 = arith.subf %120, %161 : vector<16x16x128xf32>
    %163 = math.absf %162 : vector<16x16x128xf32>
    %cst_42 = arith.constant 1.000000e+00 : f32
    %164 = vector.broadcast %cst_42 : f32 to vector<16x16x128xf32>
    %165 = arith.subf %164, %163 : vector<16x16x128xf32>
    %cst_43 = arith.constant 0.000000e+00 : f32
    %166 = vector.broadcast %cst_43 : f32 to vector<16x16x128xf32>
    %167 = arith.maximumf %166, %165 : vector<16x16x128xf32>
    %168 = arith.mulf %167, %151 : vector<16x16x128xf32>
    %cst_44 = arith.constant dense<0.000000e+00> : vector<16x128xf32>
    %169 = vector.multi_reduction <add>, %168, %cst_44 [0] : vector<16x16x128xf32> to vector<16x128xf32>
    %170 = arith.subf %159, %169 : vector<16x128xf32>
    %171 = arith.addf %146, %170 : vector<16x128xf32>
    %cst_45 = arith.constant 0.000000e+00 : f32
    %cst_46 = arith.constant 1.499000e+01 : f32
    %172 = vector.broadcast %cst_45 : f32 to vector<16x128xf32>
    %173 = arith.maximumf %172, %116 : vector<16x128xf32>
    %174 = vector.broadcast %cst_46 : f32 to vector<16x128xf32>
    %175 = arith.minimumf %174, %173 : vector<16x128xf32>
    %176 = vector.extract_strided_slice %118 {offsets = [32, 0, 0], sizes = [16, 16, 128], strides = [1, 1, 1]} : vector<64x16x128xf32> to vector<16x16x128xf32>
    %cst_47 = arith.constant dense<0xFF800000> : vector<16x128xf32>
    %177 = vector.multi_reduction <maximumf>, %176, %cst_47 [0] : vector<16x16x128xf32> to vector<16x128xf32>
    %178 = vector.shape_cast %177 : vector<16x128xf32> to vector<1x16x128xf32>
    %179 = vector.broadcast %178 : vector<1x16x128xf32> to vector<16x16x128xf32>
    %180 = arith.subf %176, %179 : vector<16x16x128xf32>
    %181 = math.exp %180 : vector<16x16x128xf32>
    %cst_48 = arith.constant dense<0.000000e+00> : vector<16x128xf32>
    %182 = vector.multi_reduction <add>, %181, %cst_48 [0] : vector<16x16x128xf32> to vector<16x128xf32>
    %183 = math.log %182 : vector<16x128xf32>
    %184 = arith.addf %183, %177 : vector<16x128xf32>
    %185 = vector.shape_cast %175 : vector<16x128xf32> to vector<1x16x128xf32>
    %186 = vector.broadcast %185 : vector<1x16x128xf32> to vector<16x16x128xf32>
    %187 = arith.subf %120, %186 : vector<16x16x128xf32>
    %188 = math.absf %187 : vector<16x16x128xf32>
    %cst_49 = arith.constant 1.000000e+00 : f32
    %189 = vector.broadcast %cst_49 : f32 to vector<16x16x128xf32>
    %190 = arith.subf %189, %188 : vector<16x16x128xf32>
    %cst_50 = arith.constant 0.000000e+00 : f32
    %191 = vector.broadcast %cst_50 : f32 to vector<16x16x128xf32>
    %192 = arith.maximumf %191, %190 : vector<16x16x128xf32>
    %193 = arith.mulf %192, %176 : vector<16x16x128xf32>
    %cst_51 = arith.constant dense<0.000000e+00> : vector<16x128xf32>
    %194 = vector.multi_reduction <add>, %193, %cst_51 [0] : vector<16x16x128xf32> to vector<16x128xf32>
    %195 = arith.subf %184, %194 : vector<16x128xf32>
    %196 = arith.addf %171, %195 : vector<16x128xf32>
    %cst_52 = arith.constant 0.000000e+00 : f32
    %cst_53 = arith.constant 1.499000e+01 : f32
    %197 = vector.broadcast %cst_52 : f32 to vector<16x128xf32>
    %198 = arith.maximumf %197, %117 : vector<16x128xf32>
    %199 = vector.broadcast %cst_53 : f32 to vector<16x128xf32>
    %200 = arith.minimumf %199, %198 : vector<16x128xf32>
    %201 = vector.extract_strided_slice %118 {offsets = [48, 0, 0], sizes = [16, 16, 128], strides = [1, 1, 1]} : vector<64x16x128xf32> to vector<16x16x128xf32>
    %cst_54 = arith.constant dense<0xFF800000> : vector<16x128xf32>
    %202 = vector.multi_reduction <maximumf>, %201, %cst_54 [0] : vector<16x16x128xf32> to vector<16x128xf32>
    %203 = vector.shape_cast %202 : vector<16x128xf32> to vector<1x16x128xf32>
    %204 = vector.broadcast %203 : vector<1x16x128xf32> to vector<16x16x128xf32>
    %205 = arith.subf %201, %204 : vector<16x16x128xf32>
    %206 = math.exp %205 : vector<16x16x128xf32>
    %cst_55 = arith.constant dense<0.000000e+00> : vector<16x128xf32>
    %207 = vector.multi_reduction <add>, %206, %cst_55 [0] : vector<16x16x128xf32> to vector<16x128xf32>
    %208 = math.log %207 : vector<16x128xf32>
    %209 = arith.addf %208, %202 : vector<16x128xf32>
    %210 = vector.shape_cast %200 : vector<16x128xf32> to vector<1x16x128xf32>
    %211 = vector.broadcast %210 : vector<1x16x128xf32> to vector<16x16x128xf32>
    %212 = arith.subf %120, %211 : vector<16x16x128xf32>
    %213 = math.absf %212 : vector<16x16x128xf32>
    %cst_56 = arith.constant 1.000000e+00 : f32
    %214 = vector.broadcast %cst_56 : f32 to vector<16x16x128xf32>
    %215 = arith.subf %214, %213 : vector<16x16x128xf32>
    %cst_57 = arith.constant 0.000000e+00 : f32
    %216 = vector.broadcast %cst_57 : f32 to vector<16x16x128xf32>
    %217 = arith.maximumf %216, %215 : vector<16x16x128xf32>
    %218 = arith.mulf %217, %201 : vector<16x16x128xf32>
    %cst_58 = arith.constant dense<0.000000e+00> : vector<16x128xf32>
    %219 = vector.multi_reduction <add>, %218, %cst_58 [0] : vector<16x16x128xf32> to vector<16x128xf32>
    %220 = arith.subf %209, %219 : vector<16x128xf32>
    %221 = arith.addf %196, %220 : vector<16x128xf32>
    %cst_59 = arith.constant 2.500000e-01 : f32
    %222 = vector.broadcast %cst_59 : f32 to vector<16x128xf32>
    %223 = arith.mulf %221, %222 : vector<16x128xf32>
    %224 = arith.mulf %223, %4 : vector<16x128xf32>
    %cst_60 = arith.constant 0.000000e+00 : f32
    %225 = vector.broadcast %cst_60 : f32 to vector<16x128xf32>
    %226 = arith.select %6, %224, %225 : vector<16x128xi1>, vector<16x128xf32>
    %c0_61 = arith.constant 0 : index
    %c0_62 = arith.constant 0 : index
    %c0_63 = arith.constant 0 : index
    %227 = vector.load %arg7[%c0_61, %c0_62, %c0_63] : memref<1x16x128xf32, #tpu.memory_space<vmem>>, vector<1x16x128xf32>
    %228 = vector.shape_cast %108 : vector<16x128xf32> to vector<1x16x128xf32>
    %229 = arith.addf %227, %228 : vector<1x16x128xf32>
    %c0_64 = arith.constant 0 : index
    %c0_65 = arith.constant 0 : index
    %c0_66 = arith.constant 0 : index
    %230 = vector.load %arg7[%c0_64, %c0_65, %c0_66] : memref<1x16x128xf32, #tpu.memory_space<vmem>>, vector<1x16x128xf32>
    tpu.vector_store %arg7[%c0_64, %c0_65, %c0_66], %229 {strides = array<i32>} : memref<1x16x128xf32, #tpu.memory_space<vmem>>, vector<1x16x128xf32>,
    %c0_67 = arith.constant 0 : index
    %c0_68 = arith.constant 0 : index
    %c0_69 = arith.constant 0 : index
    %231 = vector.load %arg8[%c0_67, %c0_68, %c0_69] : memref<1x16x128xf32, #tpu.memory_space<vmem>>, vector<1x16x128xf32>
    %232 = vector.shape_cast %226 : vector<16x128xf32> to vector<1x16x128xf32>
    %233 = arith.addf %231, %232 : vector<1x16x128xf32>
    %c0_70 = arith.constant 0 : index
    %c0_71 = arith.constant 0 : index
    %c0_72 = arith.constant 0 : index
    %234 = vector.load %arg8[%c0_70, %c0_71, %c0_72] : memref<1x16x128xf32, #tpu.memory_space<vmem>>, vector<1x16x128xf32>
    tpu.vector_store %arg8[%c0_70, %c0_71, %c0_72], %233 {strides = array<i32>} : memref<1x16x128xf32, #tpu.memory_space<vmem>>, vector<1x16x128xf32>,
    return
  }
  func.func @transform_0(%arg0: i32, %arg1: i32) -> (i32, i32, i32) {
    %c1_i32 = arith.constant 1 : i32
    %0 = arith.muli %arg0, %c1_i32 : i32
    %1 = arith.addi %0, %arg1 : i32
    %c0_i32 = arith.constant 0 : i32
    %c0_i32_0 = arith.constant 0 : i32
    %c0_i32_1 = arith.constant 0 : i32
    return %c0_i32, %1, %c0_i32_0 : i32, i32, i32
  }
  func.func @transform_1(%arg0: i32, %arg1: i32) -> (i32, i32, i32) {
    %c1_i32 = arith.constant 1 : i32
    %0 = arith.muli %arg0, %c1_i32 : i32
    %1 = arith.addi %0, %arg1 : i32
    %c0_i32 = arith.constant 0 : i32
    %c0_i32_0 = arith.constant 0 : i32
    %c0_i32_1 = arith.constant 0 : i32
    return %c0_i32, %1, %c0_i32_0 : i32, i32, i32
  }
  func.func @transform_2(%arg0: i32, %arg1: i32) -> (i32, i32, i32) {
    %c1_i32 = arith.constant 1 : i32
    %0 = arith.muli %arg0, %c1_i32 : i32
    %1 = arith.addi %0, %arg1 : i32
    %c0_i32 = arith.constant 0 : i32
    %c0_i32_0 = arith.constant 0 : i32
    %c0_i32_1 = arith.constant 0 : i32
    return %c0_i32, %1, %c0_i32_0 : i32, i32, i32
  }
  func.func @transform_3(%arg0: i32, %arg1: i32) -> (i32, i32, i32) {
    %c1_i32 = arith.constant 1 : i32
    %0 = arith.muli %arg0, %c1_i32 : i32
    %1 = arith.addi %0, %arg1 : i32
    %c0_i32 = arith.constant 0 : i32
    %c0_i32_0 = arith.constant 0 : i32
    %c0_i32_1 = arith.constant 0 : i32
    return %c0_i32, %1, %c0_i32_0 : i32, i32, i32
  }
  func.func @transform_4(%arg0: i32, %arg1: i32) -> (i32, i32, i32) {
    %c1_i32 = arith.constant 1 : i32
    %0 = arith.muli %arg0, %c1_i32 : i32
    %1 = arith.addi %0, %arg1 : i32
    %c0_i32 = arith.constant 0 : i32
    %c0_i32_0 = arith.constant 0 : i32
    %c0_i32_1 = arith.constant 0 : i32
    return %c0_i32, %1, %c0_i32_0 : i32, i32, i32
  }
  func.func @transform_5(%arg0: i32, %arg1: i32) -> (i32, i32, i32) {
    %c0_i32 = arith.constant 0 : i32
    %c0_i32_0 = arith.constant 0 : i32
    %c0_i32_1 = arith.constant 0 : i32
    return %arg0, %c0_i32, %c0_i32_0 : i32, i32, i32
  }
  func.func @transform_6(%arg0: i32, %arg1: i32) -> (i32, i32, i32) {
    %c0_i32 = arith.constant 0 : i32
    %c0_i32_0 = arith.constant 0 : i32
    %c0_i32_1 = arith.constant 0 : i32
    return %arg0, %c0_i32, %c0_i32_0 : i32, i32, i32
  }
}

</mosaic_0001>

<llo_original>
// kernel: tpu_custom_call.1
$region0: #{tpu_custom_call.1}
  #allocation0 [shape = 'u32[]', space=smem, size = 0x4, offset = 0x4, fixed_abs, tag = 'smem constant byte address 0x4 - core index']
  #allocation1 [shape = 'u32[144,128]{1,0:T(1,128)}', space=vmem, size = 0x12000, scoped, tag = 'internal scratch']
  #allocation14 [shape = 's32[]', space=sflag, size = 0x4, offset = 0, fixed_abs, tag = 'sflag constant byte address 0x0 - dummy sync flag']
  #allocation16 [shape = 's32[]', space=sflag, size = 0x4, offset = 0, fixed_abs, tag = 'sflag constant byte address 0x0 - dummy sync flag']
  #allocation18 [shape = 's32[]', space=sflag, size = 0x4, offset = 0, fixed_abs, tag = 'sflag constant byte address 0x0 - dummy sync flag']
  #allocation20 [shape = 's32[]', space=sflag, size = 0x4, offset = 0, fixed_abs, tag = 'sflag constant byte address 0x0 - dummy sync flag']
  %s0 = inlined_call_operand.hbm [shape: f32[64,32,128], index: 0, kind: input, shape index: {}]
  %s1 = inlined_call_operand.hbm [shape: f32[4,32,128], index: 1, kind: input, shape index: {}]
  %s2 = inlined_call_operand.hbm [shape: f32[4,32,128], index: 2, kind: input, shape index: {}]
  %s3 = inlined_call_operand.hbm [shape: f32[2,32,128], index: 3, kind: input, shape index: {}]
  %s4 = inlined_call_operand.hbm [shape: f32[1,32,128], index: 4, kind: input, shape index: {}]
  %s5 = inlined_call_operand.hbm [shape: f32[2,16,128], index: 5, kind: output, shape index: {0}]
  %s6 = inlined_call_operand.hbm [shape: f32[2,16,128], index: 6, kind: output, shape index: {1}]
  %7 = xla_tuple %s5, %s6
  %s8 = sld [smem:[#allocation0]]
  $region85: #{tpu_custom_call.1} parent=0
    _
  %s10 = ssub.s32 1, %s8
  %s11 = scalar_select 0, %s10, %s8
  $region1: #{tpu_custom_call.1} parent=0
    #allocation2 [shape = 'u8[1048576]{0}', space=vmem, size = 0x100000, scoped, tag = 'input window, operand 0']
    #allocation3 [shape = 's32[2]{0}', space=sflag, size = 0x8, scoped, tag = 'scoped memory for tpu_custom_call.1']
    #allocation4 [shape = 's32[2]{0}', space=sflag, size = 0x8, scoped, tag = 'scoped memory for tpu_custom_call.1']
    #allocation5 [shape = 'u8[65536]{0}', space=vmem, size = 0x10000, scoped, tag = 'input window, operand 1']
    #allocation6 [shape = 's32[2]{0}', space=sflag, size = 0x8, scoped, tag = 'scoped memory for tpu_custom_call.1']
    #allocation7 [shape = 'u8[65536]{0}', space=vmem, size = 0x10000, scoped, tag = 'input window, operand 2']
    #allocation8 [shape = 'u8[32768]{0}', space=vmem, size = 0x8000, scoped, tag = 'input window, operand 3']
    #allocation9 [shape = 's32[2]{0}', space=sflag, size = 0x8, scoped, tag = 'scoped memory for tpu_custom_call.1']
    #allocation10 [shape = 'u8[16384]{0}', space=vmem, size = 0x4000, scoped, tag = 'input window, operand 4']
    #allocation11 [shape = 'u8[16384]{0}', space=vmem, size = 0x4000, scoped, tag = 'output window, operand 0']
    #allocation12 [shape = 'u8[16384]{0}', space=vmem, size = 0x4000, scoped, tag = 'output window, operand 1']
    #allocation13 [shape = 's32[2]{0}', space=sflag, size = 0x8, scoped, tag = 'scoped memory for tpu_custom_call.1']
    %12 = vsyncpa [#allocation3], 0
    %s13 = scalar_lea.sflag [#allocation3], 1
    %14 = vsyncpa %s13, 0
    %15 = vsyncpa [#allocation6], 0
    %s16 = scalar_lea.sflag [#allocation6], 1
    %17 = vsyncpa %s16, 0
    %18 = vsyncpa [#allocation9], 0
    %s19 = scalar_lea.sflag [#allocation9], 1
    %20 = vsyncpa %s19, 0
    %21 = vsyncpa [#allocation4], 0
    %s22 = scalar_lea.sflag [#allocation4], 1
    %23 = vsyncpa %s22, 0
    %24 = vsyncpa [#allocation13], 0
    %s25 = scalar_lea.sflag [#allocation13], 1
    %26 = vsyncpa %s25, 0
    loop: start=0, step=1, limit=4
    $region2: #{tpu_custom_call.1} parent=1 // loop_pre_header
      _
    $region3: #{tpu_custom_call.1} parent=1 // loop_header
      %s28 = sphi 0, %s32
      %p29 = scmp.ge.s32.totalorder %s28, 4
      %s35 = sphi 0, %s47
      %s36 = sphi 0, %s43
      %s37 = sphi 0, %s35
      %s38 = sphi 0, %s36
      %s39 = sphi 0, %s37
      %s40 = sphi 0, %s38
      %s52 = sphi 0, %s54
      %s55 = sphi 0, %s52
      %s56 = sphi 0, %s55
      %s72 = sphi 0, %s56
      %s80 = sphi 0, %s82
      %s83 = sphi 0, %s80
      %s84 = sphi 0, %s83
      %s100 = sphi 0, %s84
      %s108 = sphi 0, %s110
      %s111 = sphi 0, %s108
      %s112 = sphi 0, %s111
      %s128 = sphi 0, %s112
      %s136 = sphi 0, %s138
      %s139 = sphi 0, %s136
      %s140 = sphi 0, %s139
      %s156 = sphi 0, %s140
      %s164 = sphi 0, %s166
      %s167 = sphi 0, %s164
      %s168 = sphi 0, %s167
      %s184 = sphi 0, %s168
      %s190 = sphi 0, %s192
      %s193 = sphi 0, %s190
      %s194 = sphi 0, %s193
      %s210 = sphi 0, %s194
      %s216 = sphi 0, %s218
      %s219 = sphi 0, %s216
      %s220 = sphi 0, %s219
      %s236 = sphi 0, %s220
    $region4: #{tpu_custom_call.1} parent=1 // loop_header_branch
      %31 = sbr.rel (%p29) target = $region8
    $region5: #{tpu_custom_call.1} parent=1 // loop_body
      %s33 = ssub.s32 %s28, 1
      %s34 = ssub.s32 %s28, 2
      %s41 = sadd.s32 1, %s36
      %p42 = scmp.ge.s32.totalorder %s41, 1
      %s43 = scalar_select %p42, 0, %s41
      %s44 = sadd.s32 1, %s35
      %s45 = scalar_select %p42, %s44, %s35
      %p46 = scmp.ge.s32.totalorder %s45, 2
      %s47 = scalar_select %p46, 0, %s45
      %s48 = sadd.s32 %s35, %s36
      %s49 = sadd.s32 %s47, %s43
      %s50 = ssub.s32 %s48, %s49
      %p51 = scmp.eq.s32.totalorder %s50, 0
      %s53 = sadd.s32 %s52, 1
      %s54 = scalar_select %p51, %s52, %s53
      %p57 = pneg %p51
      %p58 = scmp.eq.s32.totalorder %s28, 1
      %p59 = por %p57, %p58
      %p60 = scmp.ne.s32.totalorder %s52, %s55
      %p61 = scmp.eq.s32.totalorder %s28, 0
      %p62 = por %p60, %p61
      %p63 = scmp.ne.s32.totalorder %s52, %s55
      %p64 = scmp.eq.s32.totalorder %s33, 1
      %p65 = por %p63, %p64
      %p66 = scmp.ne.s32.totalorder %s55, %s56
      %p67 = scmp.eq.s32.totalorder %s33, 0
      %p68 = por %p66, %p67
      %p69 = scmp.ne.s32.totalorder %s55, %s56
      %p70 = scmp.eq.s32.totalorder %s34, 1
      %p71 = por %p69, %p70
      %p73 = scmp.ne.s32.totalorder %s56, %s72
      %p74 = scmp.eq.s32.totalorder %s34, 0
      %p75 = por %p73, %p74
      %s76 = sadd.s32 %s35, %s36
      %s77 = sadd.s32 %s47, %s43
      %s78 = ssub.s32 %s76, %s77
      %p79 = scmp.eq.s32.totalorder %s78, 0
      %s81 = sadd.s32 %s80, 1
      %s82 = scalar_select %p79, %s80, %s81
      %p85 = pneg %p79
      %p86 = scmp.eq.s32.totalorder %s28, 1
      %p87 = por %p85, %p86
      %p88 = scmp.ne.s32.totalorder %s80, %s83
      %p89 = scmp.eq.s32.totalorder %s28, 0
      %p90 = por %p88, %p89
      %p91 = scmp.ne.s32.totalorder %s80, %s83
      %p92 = scmp.eq.s32.totalorder %s33, 1
      %p93 = por %p91, %p92
      %p94 = scmp.ne.s32.totalorder %s83, %s84
      %p95 = scmp.eq.s32.totalorder %s33, 0
      %p96 = por %p94, %p95
      %p97 = scmp.ne.s32.totalorder %s83, %s84
      %p98 = scmp.eq.s32.totalorder %s34, 1
      %p99 = por %p97, %p98
      %p101 = scmp.ne.s32.totalorder %s84, %s100
      %p102 = scmp.eq.s32.totalorder %s34, 0
      %p103 = por %p101, %p102
      %s104 = sadd.s32 %s35, %s36
      %s105 = sadd.s32 %s47, %s43
      %s106 = ssub.s32 %s104, %s105
      %p107 = scmp.eq.s32.totalorder %s106, 0
      %s109 = sadd.s32 %s108, 1
      %s110 = scalar_select %p107, %s108, %s109
      %p113 = pneg %p107
      %p114 = scmp.eq.s32.totalorder %s28, 1
      %p115 = por %p113, %p114
      %p116 = scmp.ne.s32.totalorder %s108, %s111
      %p117 = scmp.eq.s32.totalorder %s28, 0
      %p118 = por %p116, %p117
      %p119 = scmp.ne.s32.totalorder %s108, %s111
      %p120 = scmp.eq.s32.totalorder %s33, 1
      %p121 = por %p119, %p120
      %p122 = scmp.ne.s32.totalorder %s111, %s112
      %p123 = scmp.eq.s32.totalorder %s33, 0
      %p124 = por %p122, %p123
      %p125 = scmp.ne.s32.totalorder %s111, %s112
      %p126 = scmp.eq.s32.totalorder %s34, 1
      %p127 = por %p125, %p126
      %p129 = scmp.ne.s32.totalorder %s112, %s128
      %p130 = scmp.eq.s32.totalorder %s34, 0
      %p131 = por %p129, %p130
      %s132 = sadd.s32 %s35, %s36
      %s133 = sadd.s32 %s47, %s43
      %s134 = ssub.s32 %s132, %s133
      %p135 = scmp.eq.s32.totalorder %s134, 0
      %s137 = sadd.s32 %s136, 1
      %s138 = scalar_select %p135, %s136, %s137
      %p141 = pneg %p135
      %p142 = scmp.eq.s32.totalorder %s28, 1
      %p143 = por %p141, %p142
      %p144 = scmp.ne.s32.totalorder %s136, %s139
      %p145 = scmp.eq.s32.totalorder %s28, 0
      %p146 = por %p144, %p145
      %p147 = scmp.ne.s32.totalorder %s136, %s139
      %p148 = scmp.eq.s32.totalorder %s33, 1
      %p149 = por %p147, %p148
      %p150 = scmp.ne.s32.totalorder %s139, %s140
      %p151 = scmp.eq.s32.totalorder %s33, 0
      %p152 = por %p150, %p151
      %p153 = scmp.ne.s32.totalorder %s139, %s140
      %p154 = scmp.eq.s32.totalorder %s34, 1
      %p155 = por %p153, %p154
      %p157 = scmp.ne.s32.totalorder %s140, %s156
      %p158 = scmp.eq.s32.totalorder %s34, 0
      %p159 = por %p157, %p158
      %s160 = sadd.s32 %s35, %s36
      %s161 = sadd.s32 %s47, %s43
      %s162 = ssub.s32 %s160, %s161
      %p163 = scmp.eq.s32.totalorder %s162, 0
      %s165 = sadd.s32 %s164, 1
      %s166 = scalar_select %p163, %s164, %s165
      %p169 = pneg %p163
      %p170 = scmp.eq.s32.totalorder %s28, 1
      %p171 = por %p169, %p170
      %p172 = scmp.ne.s32.totalorder %s164, %s167
      %p173 = scmp.eq.s32.totalorder %s28, 0
      %p174 = por %p172, %p173
      %p175 = scmp.ne.s32.totalorder %s164, %s167
      %p176 = scmp.eq.s32.totalorder %s33, 1
      %p177 = por %p175, %p176
      %p178 = scmp.ne.s32.totalorder %s167, %s168
      %p179 = scmp.eq.s32.totalorder %s33, 0
      %p180 = por %p178, %p179
      %p181 = scmp.ne.s32.totalorder %s167, %s168
      %p182 = scmp.eq.s32.totalorder %s34, 1
      %p183 = por %p181, %p182
      %p185 = scmp.ne.s32.totalorder %s168, %s184
      %p186 = scmp.eq.s32.totalorder %s34, 0
      %p187 = por %p185, %p186
      %s188 = ssub.s32 %s35, %s47
      %p189 = scmp.eq.s32.totalorder %s188, 0
      %s191 = sadd.s32 %s190, 1
      %s192 = scalar_select %p189, %s190, %s191
      %p195 = pneg %p189
      %p196 = scmp.eq.s32.totalorder %s28, 1
      %p197 = por %p195, %p196
      %p198 = scmp.ne.s32.totalorder %s190, %s193
      %p199 = scmp.eq.s32.totalorder %s28, 0
      %p200 = por %p198, %p199
      %p201 = scmp.ne.s32.totalorder %s190, %s193
      %p202 = scmp.eq.s32.totalorder %s33, 1
      %p203 = por %p201, %p202
      %p204 = scmp.ne.s32.totalorder %s193, %s194
      %p205 = scmp.eq.s32.totalorder %s33, 0
      %p206 = por %p204, %p205
      %p207 = scmp.ne.s32.totalorder %s193, %s194
      %p208 = scmp.eq.s32.totalorder %s34, 1
      %p209 = por %p207, %p208
      %p211 = scmp.ne.s32.totalorder %s194, %s210
      %p212 = scmp.eq.s32.totalorder %s34, 0
      %p213 = por %p211, %p212
      %s214 = ssub.s32 %s35, %s47
      %p215 = scmp.eq.s32.totalorder %s214, 0
      %s217 = sadd.s32 %s216, 1
      %s218 = scalar_select %p215, %s216, %s217
      %p221 = pneg %p215
      %p222 = scmp.eq.s32.totalorder %s28, 1
      %p223 = por %p221, %p222
      %p224 = scmp.ne.s32.totalorder %s216, %s219
      %p225 = scmp.eq.s32.totalorder %s28, 0
      %p226 = por %p224, %p225
      %p227 = scmp.ne.s32.totalorder %s216, %s219
      %p228 = scmp.eq.s32.totalorder %s33, 1
      %p229 = por %p227, %p228
      %p230 = scmp.ne.s32.totalorder %s219, %s220
      %p231 = scmp.eq.s32.totalorder %s33, 0
      %p232 = por %p230, %p231
      %p233 = scmp.ne.s32.totalorder %s219, %s220
      %p234 = scmp.eq.s32.totalorder %s34, 1
      %p235 = por %p233, %p234
      %p237 = scmp.ne.s32.totalorder %s220, %s236
      %p238 = scmp.eq.s32.totalorder %s34, 0
      %p239 = por %p237, %p238
      %p240 = scmp.le.s32.totalorder 1, %s28
      %p241 = scmp.lt.s32.totalorder %s28, 3
      %p242 = pnand %p240, %p241
      %p243 = pneg %p242
      // Predicated region
      $region9: #{tpu_custom_call.1} parent=5 // pred_check
        _
      $region10: #{tpu_custom_call.1} parent=5 // pred_check_branch
        %245 = sbr.rel (%p242) target = $region12
      $region11: #{tpu_custom_call.1} parent=5 // pred_region
        %s246 = ssub.s32 %s28, 1
      $region12: #{tpu_custom_call.1} parent=5 // pred_fallthru
        _
      %p247 = scmp.lt.s32.totalorder %s28, 2
      // Predicated region
      $region13: #{tpu_custom_call.1} parent=5 // pred_check
        %p248 = pneg %p247
      $region14: #{tpu_custom_call.1} parent=5 // pred_check_branch
        %250 = sbr.rel (%p248) target = $region16
      $region15: #{tpu_custom_call.1} parent=5 // pred_region
        // Predicated region
        $region17: #{tpu_custom_call.1} parent=15 // pred_check
          %p251 = pneg %p62
        $region18: #{tpu_custom_call.1} parent=15 // pred_check_branch
          %253 = sbr.rel (%p251) target = $region20
        $region19: #{tpu_custom_call.1} parent=15 // pred_region
          #allocation15 [shape = 'u32[6]{0}', space=smem, size = 0x18, scoped, tag = 'DMA stride descriptor']
          %s254 = sand.u32 %s52, 1
          %s255 = scalar_lea.sflag [#allocation3], %s254
          %s256 = sand.u32 %s52, 1
          %s257 = smul.addr %s256, 1024
          %s258 = scalar_lea.vmem [#allocation2], %s257
          %s259 = sadd.s32 %s35, %s36
          %s260 = smul.u32 2, %s259
          %s262 = ssub.s32 16384, 16384
          %263 = vsyncadd %s255, %s262
          %s264 = smul.addr %s260, 128
          %s265 = scalar_lea.hbm %s0, %s264
          %s267 = sshll.u32 1, 14
          %s268 = sxor.u32 4294967295, %s267
          %s270 = sld [smem:[#allocation0]]
          %s271 = sadd.s32 2, %s270
          %s273 = sshll.u32 7, 26
          %s274 = sxor.u32 4294967295, %s273
          %s275 = sand.u32 0, %s274
          %s276 = sshll.u32 %s271, 26
          %s277 = sor.u32 %s275, %s276
          %s278 = sshll.u32 %s258, 4
          %s279 = int_to_ptr.vmem [resolvable:$true] %s278
          %285 = sst [smem:[#allocation15]] 512
          %s286 = scalar_lea.smem [#allocation15], 1
          %287 = sst [smem:[%s286]] 256
          %s288 = scalar_lea.smem [#allocation15], 2
          %289 = sst [smem:[%s288]] 2
          %s290 = scalar_lea.smem [#allocation15], 3
          %291 = sst [smem:[%s290]] 128
          %s292 = scalar_lea.smem [#allocation15], 4
          %293 = sst [smem:[%s292]] 128
          %s294 = scalar_lea.smem [#allocation15], 5
          %295 = sst [smem:[%s294]] 8
          %297 = dma.general %s265, 16384, %s279, %s255, [#allocation14], [#allocation15], %s277, 0
        $region20: #{tpu_custom_call.1} parent=15 // pred_fallthru
          _
        // Predicated region
        $region21: #{tpu_custom_call.1} parent=15 // pred_check
          %p298 = pneg %p90
        $region22: #{tpu_custom_call.1} parent=15 // pred_check_branch
          %300 = sbr.rel (%p298) target = $region24
        $region23: #{tpu_custom_call.1} parent=15 // pred_region
          #allocation17 [shape = 'u32[6]{0}', space=smem, size = 0x18, scoped, tag = 'DMA stride descriptor']
          %s301 = sand.u32 %s28, 1
          %s302 = scalar_lea.sflag [#allocation6], %s301
          %s303 = sand.u32 %s80, 1
          %s304 = smul.addr %s303, 64
          %s305 = scalar_lea.vmem [#allocation5], %s304
          %s306 = sadd.s32 %s35, %s36
          %s307 = smul.u32 2, %s306
          %s309 = ssub.s32 1024, 1024
          %310 = vsyncadd %s302, %s309
          %s311 = smul.addr %s307, 128
          %s312 = scalar_lea.hbm %s1, %s311
          %s314 = sshll.u32 1, 14
          %s315 = sxor.u32 4294967295, %s314
          %s317 = sld [smem:[#allocation0]]
          %s318 = sadd.s32 2, %s317
          %s320 = sshll.u32 7, 26
          %s321 = sxor.u32 4294967295, %s320
          %s322 = sand.u32 0, %s321
          %s323 = sshll.u32 %s318, 26
          %s324 = sor.u32 %s322, %s323
          %s325 = sshll.u32 %s305, 4
          %s326 = int_to_ptr.vmem [resolvable:$true] %s325
          %332 = sst [smem:[#allocation17]] 512
          %s333 = scalar_lea.smem [#allocation17], 1
          %334 = sst [smem:[%s333]] 256
          %s335 = scalar_lea.smem [#allocation17], 2
          %336 = sst [smem:[%s335]] 2
          %s337 = scalar_lea.smem [#allocation17], 3
          %338 = sst [smem:[%s337]] 128
          %s339 = scalar_lea.smem [#allocation17], 4
          %340 = sst [smem:[%s339]] 128
          %s341 = scalar_lea.smem [#allocation17], 5
          %342 = sst [smem:[%s341]] 8
          %344 = dma.general %s312, 1024, %s326, %s302, [#allocation16], [#allocation17], %s324, 0
        $region24: #{tpu_custom_call.1} parent=15 // pred_fallthru
          _
        // Predicated region
        $region25: #{tpu_custom_call.1} parent=15 // pred_check
          %p345 = pneg %p118
        $region26: #{tpu_custom_call.1} parent=15 // pred_check_branch
          %347 = sbr.rel (%p345) target = $region28
        $region27: #{tpu_custom_call.1} parent=15 // pred_region
          #allocation19 [shape = 'u32[6]{0}', space=smem, size = 0x18, scoped, tag = 'DMA stride descriptor']
          %s348 = sand.u32 %s28, 1
          %s349 = scalar_lea.sflag [#allocation6], %s348
          %s350 = sand.u32 %s108, 1
          %s351 = smul.addr %s350, 64
          %s352 = scalar_lea.vmem [#allocation7], %s351
          %s353 = sadd.s32 %s35, %s36
          %s354 = smul.u32 2, %s353
          %s356 = ssub.s32 1024, 1024
          %357 = vsyncadd %s349, %s356
          %s358 = smul.addr %s354, 128
          %s359 = scalar_lea.hbm %s2, %s358
          %s361 = sshll.u32 1, 14
          %s362 = sxor.u32 4294967295, %s361
          %s364 = sld [smem:[#allocation0]]
          %s365 = sadd.s32 2, %s364
          %s367 = sshll.u32 7, 26
          %s368 = sxor.u32 4294967295, %s367
          %s369 = sand.u32 0, %s368
          %s370 = sshll.u32 %s365, 26
          %s371 = sor.u32 %s369, %s370
          %s372 = sshll.u32 %s352, 4
          %s373 = int_to_ptr.vmem [resolvable:$true] %s372
          %379 = sst [smem:[#allocation19]] 512
          %s380 = scalar_lea.smem [#allocation19], 1
          %381 = sst [smem:[%s380]] 256
          %s382 = scalar_lea.smem [#allocation19], 2
          %383 = sst [smem:[%s382]] 2
          %s384 = scalar_lea.smem [#allocation19], 3
          %385 = sst [smem:[%s384]] 128
          %s386 = scalar_lea.smem [#allocation19], 4
          %387 = sst [smem:[%s386]] 128
          %s388 = scalar_lea.smem [#allocation19], 5
          %389 = sst [smem:[%s388]] 8
          %391 = dma.general %s359, 1024, %s373, %s349, [#allocation18], [#allocation19], %s371, 0
        $region28: #{tpu_custom_call.1} parent=15 // pred_fallthru
          _
        // Predicated region
        $region29: #{tpu_custom_call.1} parent=15 // pred_check
          %p392 = pneg %p146
        $region30: #{tpu_custom_call.1} parent=15 // pred_check_branch
          %394 = sbr.rel (%p392) target = $region32
        $region31: #{tpu_custom_call.1} parent=15 // pred_region
          #allocation21 [shape = 'u32[6]{0}', space=smem, size = 0x18, scoped, tag = 'DMA stride descriptor']
          %s395 = sand.u32 %s28, 1
          %s396 = scalar_lea.sflag [#allocation9], %s395
          %s397 = sand.u32 %s136, 1
          %s398 = smul.addr %s397, 32
          %s399 = scalar_lea.vmem [#allocation8], %s398
          %s400 = sadd.s32 %s35, %s36
          %s401 = smul.u32 2, %s400
          %s403 = ssub.s32 512, 512
          %404 = vsyncadd %s396, %s403
          %s405 = smul.addr %s401, 128
          %s406 = scalar_lea.hbm %s3, %s405
          %s408 = sshll.u32 1, 14
          %s409 = sxor.u32 4294967295, %s408
          %s411 = sld [smem:[#allocation0]]
          %s412 = sadd.s32 2, %s411
          %s414 = sshll.u32 7, 26
          %s415 = sxor.u32 4294967295, %s414
          %s416 = sand.u32 0, %s415
          %s417 = sshll.u32 %s412, 26
          %s418 = sor.u32 %s416, %s417
          %s419 = sshll.u32 %s399, 4
          %s420 = int_to_ptr.vmem [resolvable:$true] %s419
          %426 = sst [smem:[#allocation21]] 512
          %s427 = scalar_lea.smem [#allocation21], 1
          %428 = sst [smem:[%s427]] 256
          %s429 = scalar_lea.smem [#allocation21], 2
          %430 = sst [smem:[%s429]] 2
          %s431 = scalar_lea.smem [#allocation21], 3
          %432 = sst [smem:[%s431]] 128
          %s433 = scalar_lea.smem [#allocation21], 4
          %434 = sst [smem:[%s433]] 128
          %s435 = scalar_lea.smem [#allocation21], 5
          %436 = sst [smem:[%s435]] 8
          %438 = dma.general %s406, 512, %s420, %s396, [#allocation20], [#allocation21], %s418, 0
        $region32: #{tpu_custom_call.1} parent=15 // pred_fallthru
          _
        // Predicated region
        $region33: #{tpu_custom_call.1} parent=15 // pred_check
          %p439 = pneg %p174
        $region34: #{tpu_custom_call.1} parent=15 // pred_check_branch
          %441 = sbr.rel (%p439) target = $region36
        $region35: #{tpu_custom_call.1} parent=15 // pred_region
          %s442 = sand.u32 %s28, 1
          %s443 = scalar_lea.sflag [#allocation9], %s442
          %s444 = sand.u32 %s164, 1
          %s445 = smul.addr %s444, 16
          %s446 = scalar_lea.vmem [#allocation10], %s445
          %s447 = sadd.s32 %s35, %s36
          %s448 = smul.u32 2, %s447
          %s450 = ssub.s32 256, 256
          %451 = vsyncadd %s443, %s450
          %s452 = smul.addr %s448, 128
          %s453 = scalar_lea.hbm %s4, %s452
          %s454 = sshll.u32 %s446, 4
          %s455 = int_to_ptr.vmem [resolvable:$true] %s454
          %460 = dma.hbm_to_vmem [thread:$0]  %s453, 256, %s455, %s443, 128, 128, 8
        $region36: #{tpu_custom_call.1} parent=15 // pred_fallthru
          _
      $region16: #{tpu_custom_call.1} parent=5 // pred_fallthru
        _
      %p461 = scmp.le.s32.totalorder 1, %s28
      %p462 = scmp.lt.s32.totalorder %s28, 3
      %p463 = pnand %p461, %p462
      %p464 = pneg %p463
      // Predicated region
      $region37: #{tpu_custom_call.1} parent=5 // pred_check
        _
      $region38: #{tpu_custom_call.1} parent=5 // pred_check_branch
        %466 = sbr.rel (%p463) target = $region40
      $region39: #{tpu_custom_call.1} parent=5 // pred_region
        %s467 = ssub.s32 %s28, 1
        %s468 = sand.u32 %s55, 1
        %s469 = scalar_lea.sflag [#allocation3], %s468
        %s470 = sand.u32 %s55, 1
        %s471 = smul.addr %s470, 1024
        %s472 = scalar_lea.vmem [#allocation2], %s471
        // Predicated region
        $region41: #{tpu_custom_call.1} parent=39 // pred_check
          %p473 = pneg %p68
        $region42: #{tpu_custom_call.1} parent=39 // pred_check_branch
          %475 = sbr.rel (%p473) target = $region44
        $region43: #{tpu_custom_call.1} parent=39 // pred_region
          %476 = dma.done %s469, 16384
        $region44: #{tpu_custom_call.1} parent=39 // pred_fallthru
          _
        %s477 = sand.u32 %s33, 1
        %s478 = scalar_lea.sflag [#allocation6], %s477
        %s479 = sand.u32 %s83, 1
        %s480 = smul.addr %s479, 64
        %s481 = scalar_lea.vmem [#allocation5], %s480
        // Predicated region
        $region45: #{tpu_custom_call.1} parent=39 // pred_check
          %p482 = pneg %p96
        $region46: #{tpu_custom_call.1} parent=39 // pred_check_branch
          %484 = sbr.rel (%p482) target = $region48
        $region47: #{tpu_custom_call.1} parent=39 // pred_region
          %485 = dma.done %s478, 1024
        $region48: #{tpu_custom_call.1} parent=39 // pred_fallthru
          _
        %s486 = sand.u32 %s33, 1
        %s487 = scalar_lea.sflag [#allocation6], %s486
        %s488 = sand.u32 %s111, 1
        %s489 = smul.addr %s488, 64
        %s490 = scalar_lea.vmem [#allocation7], %s489
        // Predicated region
        $region49: #{tpu_custom_call.1} parent=39 // pred_check
          %p491 = pneg %p124
        $region50: #{tpu_custom_call.1} parent=39 // pred_check_branch
          %493 = sbr.rel (%p491) target = $region52
        $region51: #{tpu_custom_call.1} parent=39 // pred_region
          %494 = dma.done %s487, 1024
        $region52: #{tpu_custom_call.1} parent=39 // pred_fallthru
          _
        %s495 = sand.u32 %s33, 1
        %s496 = scalar_lea.sflag [#allocation9], %s495
        %s497 = sand.u32 %s139, 1
        %s498 = smul.addr %s497, 32
        %s499 = scalar_lea.vmem [#allocation8], %s498
        // Predicated region
        $region53: #{tpu_custom_call.1} parent=39 // pred_check
          %p500 = pneg %p152
        $region54: #{tpu_custom_call.1} parent=39 // pred_check_branch
          %502 = sbr.rel (%p500) target = $region56
        $region55: #{tpu_custom_call.1} parent=39 // pred_region
          %503 = dma.done %s496, 512
        $region56: #{tpu_custom_call.1} parent=39 // pred_fallthru
          _
        %s504 = sand.u32 %s33, 1
        %s505 = scalar_lea.sflag [#allocation9], %s504
        %s506 = sand.u32 %s167, 1
        %s507 = smul.addr %s506, 16
        %s508 = scalar_lea.vmem [#allocation10], %s507
        // Predicated region
        $region57: #{tpu_custom_call.1} parent=39 // pred_check
          %p509 = pneg %p180
        $region58: #{tpu_custom_call.1} parent=39 // pred_check_branch
          %511 = sbr.rel (%p509) target = $region60
        $region59: #{tpu_custom_call.1} parent=39 // pred_region
          %512 = dma.done %s505, 256
        $region60: #{tpu_custom_call.1} parent=39 // pred_fallthru
          _
        %s513 = sand.u32 %s55, 1
        %s514 = scalar_lea.sflag [#allocation3], %s513
        %s515 = sand.u32 %s55, 1
        %s516 = smul.addr %s515, 1024
        %s517 = scalar_lea.vmem [#allocation2], %s516
        %p518 = pneg %p68
        %p519 = pneg %p65
        %s520 = sand.u32 %s33, 1
        %s521 = scalar_lea.sflag [#allocation6], %s520
        %s522 = sand.u32 %s83, 1
        %s523 = smul.addr %s522, 64
        %s524 = scalar_lea.vmem [#allocation5], %s523
        %p525 = pneg %p96
        %p526 = pneg %p93
        %s527 = sand.u32 %s33, 1
        %s528 = scalar_lea.sflag [#allocation6], %s527
        %s529 = sand.u32 %s111, 1
        %s530 = smul.addr %s529, 64
        %s531 = scalar_lea.vmem [#allocation7], %s530
        %p532 = pneg %p124
        %p533 = pneg %p121
        %s534 = sand.u32 %s33, 1
        %s535 = scalar_lea.sflag [#allocation9], %s534
        %s536 = sand.u32 %s139, 1
        %s537 = smul.addr %s536, 32
        %s538 = scalar_lea.vmem [#allocation8], %s537
        %p539 = pneg %p152
        %p540 = pneg %p149
        %s541 = sand.u32 %s33, 1
        %s542 = scalar_lea.sflag [#allocation9], %s541
        %s543 = sand.u32 %s167, 1
        %s544 = smul.addr %s543, 16
        %s545 = scalar_lea.vmem [#allocation10], %s544
        %p546 = pneg %p180
        %p547 = pneg %p177
        %p548 = pneg %p206
        %p549 = pneg %p203
        %s550 = sand.u32 %s193, 1
        %s551 = scalar_lea.sflag [#allocation4], %s550
        %s552 = sand.u32 %s193, 1
        %s553 = smul.addr %s552, 16
        %s554 = scalar_lea.vmem [#allocation11], %s553
        %p555 = pneg %p232
        %p556 = pneg %p229
        %s557 = sand.u32 %s219, 1
        %s558 = scalar_lea.sflag [#allocation13], %s557
        %s559 = sand.u32 %s219, 1
        %s560 = smul.addr %s559, 16
        %s561 = scalar_lea.vmem [#allocation12], %s560
        %s562 = sadd.s32 %s37, %s38
        %s563 = smul.u32 2, %s562
        %s564 = sadd.s32 %s37, %s38
        %s565 = smul.u32 2, %s564
        %s566 = sadd.s32 %s37, %s38
        %s567 = smul.u32 2, %s566
        %s568 = sadd.s32 %s37, %s38
        %s569 = smul.u32 2, %s568
        %s570 = sadd.s32 %s37, %s38
        %s571 = smul.u32 2, %s570
        %p572 = scmp.eq.s32.totalorder %s38, 0
        // Predicated region
        $region61: #{tpu_custom_call.1} parent=39 // pred_check
          %p573 = pneg %p572
        $region62: #{tpu_custom_call.1} parent=39 // pred_check_branch
          %575 = sbr.rel (%p573) target = $region64
        $region63: #{tpu_custom_call.1} parent=39 // pred_region
          %576 = vst [vmem:[%s554] sm:$0xff] 0.0
          %577 = vst [vmem:[%s554 + $0x8] sm:$0xff] 0.0
          %578 = vst [vmem:[%s561] sm:$0xff] 0.0
          %579 = vst [vmem:[%s561 + $0x8] sm:$0xff] 0.0
        $region64: #{tpu_custom_call.1} parent=39 // pred_fallthru
          _
        %v580 = vld [vmem:[%s508] sm:$0xff]
        %v581 = vld [vmem:[%s508 + $0x8] sm:$0xff]
        %vm582 = vcmp.gt.f32.partialorder %v580, 0.0
        %vm583 = vcmp.gt.f32.partialorder %v581, 0.0
        %v584 = vld [vmem:[%s481] sm:$0xff]
        %v585 = vld [vmem:[%s481 + $0x8] sm:$0xff]
        %v586 = vld [vmem:[%s481 + $0x10] sm:$0xff]
        %v587 = vld [vmem:[%s481 + $0x18] sm:$0xff]
        %v588 = vld [vmem:[%s481 + $0x20] sm:$0xff]
        %v589 = vld [vmem:[%s481 + $0x28] sm:$0xff]
        %v590 = vld [vmem:[%s481 + $0x30] sm:$0xff]
        %v591 = vld [vmem:[%s481 + $0x38] sm:$0xff]
        %v592 = vld [vmem:[%s490] sm:$0xff]
        %v593 = vld [vmem:[%s490 + $0x8] sm:$0xff]
        %v594 = vld [vmem:[%s490 + $0x10] sm:$0xff]
        %v595 = vld [vmem:[%s490 + $0x18] sm:$0xff]
        %v596 = vld [vmem:[%s490 + $0x20] sm:$0xff]
        %v597 = vld [vmem:[%s490 + $0x28] sm:$0xff]
        %v598 = vld [vmem:[%s490 + $0x30] sm:$0xff]
        %v599 = vld [vmem:[%s490 + $0x38] sm:$0xff]
        %v600 = vsub.f32 %v588, %v584
        %v601 = vsub.f32 %v589, %v585
        %v602 = vsub.f32 %v590, %v586
        %v603 = vsub.f32 %v591, %v587
        %v604 = vadd.f32 %v602, 1e-07
        %v605 = vadd.f32 %v603, 1e-07
        %v606 = vsub.f32 %v596, %v592
        %v607 = vsub.f32 %v597, %v593
        %v608 = vsub.f32 %v598, %v594
        %v609 = vsub.f32 %v599, %v595
        %v610 = vadd.f32 %v608, 1e-07
        %v611 = vadd.f32 %v609, 1e-07
        %v612 = vmin.f32 %v588, %v596
        %v613 = vmin.f32 %v589, %v597
        %v614 = vmax.f32 %v584, %v592
        %v615 = vmax.f32 %v585, %v593
        %v616 = vsub.f32 %v612, %v614
        %v617 = vsub.f32 %v613, %v615
        %v618 = vmax.f32 %v616, 0.0
        %v619 = vmax.f32 %v617, 0.0
        %v620 = vmin.f32 %v590, %v598
        %v621 = vmin.f32 %v591, %v599
        %v622 = vmax.f32 %v586, %v594
        %v623 = vmax.f32 %v587, %v595
        %v624 = vsub.f32 %v620, %v622
        %v625 = vsub.f32 %v621, %v623
        %v626 = vmax.f32 %v624, 0.0
        %v627 = vmax.f32 %v625, 0.0
        %v628 = vmul.f32 %v618, %v626
        %v629 = vmul.f32 %v619, %v627
        %v630 = vmul.f32 %v600, %v604
        %v631 = vmul.f32 %v601, %v605
        %v632 = vmul.f32 %v606, %v610
        %v633 = vmul.f32 %v607, %v611
        %v634 = vadd.f32 %v630, %v632
        %v635 = vadd.f32 %v631, %v633
        %v636 = vsub.f32 %v634, %v628
        %v637 = vsub.f32 %v635, %v629
        %v638 = vadd.f32 %v636, 1e-07
        %v639 = vadd.f32 %v637, 1e-07
        %v640 = vrcp.pop %v638
        %v641 = vmul.f32 %v628, %v640
        %v642 = vrcp.pop %v639
        %v643 = vmul.f32 %v629, %v642
        %v644 = vmax.f32 %v588, %v596
        %v645 = vmax.f32 %v589, %v597
        %v646 = vmin.f32 %v584, %v592
        %v647 = vmin.f32 %v585, %v593
        %v648 = vsub.f32 %v644, %v646
        %v649 = vsub.f32 %v645, %v647
        %v650 = vmax.f32 %v590, %v598
        %v651 = vmax.f32 %v591, %v599
        %v652 = vmin.f32 %v586, %v594
        %v653 = vmin.f32 %v587, %v595
        %v654 = vsub.f32 %v650, %v652
        %v655 = vsub.f32 %v651, %v653
        %v656 = vmin.f32 %v588, %v584
        %v657 = vmin.f32 %v589, %v585
        %v658 = vmin.f32 %v596, %v592
        %v659 = vmin.f32 %v597, %v593
        %v660 = vsub.f32 %v656, %v658
        %v661 = vsub.f32 %v657, %v659
        %v662 = vand.u32 2147483647, %v660
        %v663 = vand.u32 2147483647, %v661
        %v664 = vmax.f32 %v588, %v584
        %v665 = vmax.f32 %v589, %v585
        %v666 = vmax.f32 %v596, %v592
        %v667 = vmax.f32 %v597, %v593
        %v668 = vsub.f32 %v664, %v666
        %v669 = vsub.f32 %v665, %v667
        %v670 = vand.u32 2147483647, %v668
        %v671 = vand.u32 2147483647, %v669
        %v672 = vmin.f32 %v590, %v586
        %v673 = vmin.f32 %v591, %v587
        %v674 = vmin.f32 %v598, %v594
        %v675 = vmin.f32 %v599, %v595
        %v676 = vsub.f32 %v672, %v674
        %v677 = vsub.f32 %v673, %v675
        %v678 = vand.u32 2147483647, %v676
        %v679 = vand.u32 2147483647, %v677
        %v680 = vmax.f32 %v590, %v586
        %v681 = vmax.f32 %v591, %v587
        %v682 = vmax.f32 %v598, %v594
        %v683 = vmax.f32 %v599, %v595
        %v684 = vsub.f32 %v680, %v682
        %v685 = vsub.f32 %v681, %v683
        %v686 = vand.u32 2147483647, %v684
        %v687 = vand.u32 2147483647, %v685
        %v688 = vadd.f32 %v662, %v670
        %v689 = vadd.f32 %v663, %v671
        %v690 = vrcp.pop %v648
        %v691 = vrcp.pop %v649
        %v692 = vmul.f32 %v688, %v690
        %v693 = vmul.f32 %v689, %v691
        %v694 = vadd.f32 %v678, %v686
        %v695 = vadd.f32 %v679, %v687
        %v696 = vrcp.pop %v654
        %v697 = vrcp.pop %v655
        %v698 = vmul.f32 %v694, %v696
        %v699 = vmul.f32 %v695, %v697
        %v700 = vadd.f32 %v692, %v698
        %v701 = vadd.f32 %v693, %v699
        %v702 = vmul.f32 %v700, 0.25
        %v703 = vmul.f32 %v701, 0.25
        %v704 = vsub.f32 1.0, %v641
        %v705 = vsub.f32 1.0, %v643
        %v706 = vmul.f32 %v702, %v702
        %v707 = vmul.f32 %v703, %v703
        %v708 = vsub.f32 0.0, %v706
        %v709 = vsub.f32 0.0, %v707
        %v710 = vmul.f32 %v708, 1.442695
        %v711 = vpow.pop %v710
        %v712 = vmul.f32 %v709, 1.442695
        %v713 = vpow.pop %v712
        %v714 = vsub.f32 %v704, %v711
        %v715 = vsub.f32 %v705, %v713
        %v716 = vadd.f32 %v714, 1.0
        %v717 = vadd.f32 %v715, 1.0
        %v718 = vsub.f32 0.0, %v702
        %v719 = vsub.f32 0.0, %v703
        %v720 = vmul.f32 %v718, 1.442695
        %v721 = vpow.pop %v720
        %v722 = vmul.f32 %v719, 1.442695
        %v723 = vpow.pop %v722
        %v724 = vmul.f32 %v721, 1.3
        %v725 = vmul.f32 %v723, 1.3
        %v726 = vmul.f32 %v724, 3.0
        %v727 = vmul.f32 %v725, 3.0
        %v728 = vmul.f32 %v724, %v724
        %v729 = vmul.f32 %v725, %v725
        %v730 = vsub.f32 0.0, %v728
        %v731 = vsub.f32 0.0, %v729
        %v732 = vmul.f32 %v730, 1.442695
        %v733 = vpow.pop %v732
        %v734 = vmul.f32 %v731, 1.442695
        %v735 = vpow.pop %v734
        %v736 = vmul.f32 %v726, %v733
        %v737 = vmul.f32 %v727, %v735
        %v738 = vmul.f32 %v736, %v716
        %v739 = vmul.f32 %v737, %v717
        %v740 = vsub.f32 1.0, %v738
        %v741 = vsub.f32 1.0, %v739
        %v742 = vmul.f32 %v740, %v580
        %v743 = vmul.f32 %v741, %v581
        %v744 = vsel %vm582, %v742, 0.0
        %v745 = vsel %vm583, %v743, 0.0
        %v746 = vld [vmem:[%s499] sm:$0xff]
        %v747 = vld [vmem:[%s499 + $0x8] sm:$0xff]
        %v748 = vld [vmem:[%s499 + $0x10] sm:$0xff]
        %v749 = vld [vmem:[%s499 + $0x18] sm:$0xff]
        %v750 = vsub.f32 %v746, %v592
        %v751 = vsub.f32 %v747, %v593
        %v752 = vsub.f32 %v748, %v594
        %v753 = vsub.f32 %v749, %v595
        %v754 = vsub.f32 %v596, %v746
        %v755 = vsub.f32 %v597, %v747
        %v756 = vsub.f32 %v598, %v748
        %v757 = vsub.f32 %v599, %v749
        %v758 = vld [vmem:[%s472] sm:$0xff]
        %v759 = vld [vmem:[%s472 + $0x8] sm:$0xff]
        %v760 = vld [vmem:[%s472 + $0x10] sm:$0xff]
        %v761 = vld [vmem:[%s472 + $0x18] sm:$0xff]
        %v762 = vld [vmem:[%s472 + $0x20] sm:$0xff]
        %v763 = vld [vmem:[%s472 + $0x28] sm:$0xff]
        %v764 = vld [vmem:[%s472 + $0x30] sm:$0xff]
        %v765 = vld [vmem:[%s472 + $0x38] sm:$0xff]
        %v766 = vld [vmem:[%s472 + $0x40] sm:$0xff]
        %v767 = vld [vmem:[%s472 + $0x48] sm:$0xff]
        %v768 = vld [vmem:[%s472 + $0x50] sm:$0xff]
        %v769 = vld [vmem:[%s472 + $0x58] sm:$0xff]
        %v770 = vld [vmem:[%s472 + $0x60] sm:$0xff]
        %v771 = vld [vmem:[%s472 + $0x68] sm:$0xff]
        %v772 = vld [vmem:[%s472 + $0x70] sm:$0xff]
        %v773 = vld [vmem:[%s472 + $0x78] sm:$0xff]
        %v774 = vld [vmem:[%s472 + $0x80] sm:$0xff]
        %v775 = vld [vmem:[%s472 + $0x88] sm:$0xff]
        %v776 = vld [vmem:[%s472 + $0x90] sm:$0xff]
        %v777 = vld [vmem:[%s472 + $0x98] sm:$0xff]
        %v778 = vld [vmem:[%s472 + $0xa0] sm:$0xff]
        %v779 = vld [vmem:[%s472 + $0xa8] sm:$0xff]
        %v780 = vld [vmem:[%s472 + $0xb0] sm:$0xff]
        %v781 = vld [vmem:[%s472 + $0xb8] sm:$0xff]
        %v782 = vld [vmem:[%s472 + $0xc0] sm:$0xff]
        %v783 = vld [vmem:[%s472 + $0xc8] sm:$0xff]
        %v784 = vld [vmem:[%s472 + $0xd0] sm:$0xff]
        %v785 = vld [vmem:[%s472 + $0xd8] sm:$0xff]
        %v786 = vld [vmem:[%s472 + $0xe0] sm:$0xff]
        %v787 = vld [vmem:[%s472 + $0xe8] sm:$0xff]
        %v788 = vld [vmem:[%s472 + $0xf0] sm:$0xff]
        %v789 = vld [vmem:[%s472 + $0xf8] sm:$0xff]
        %v790 = vld [vmem:[%s472 + $0x100] sm:$0xff]
        %v791 = vld [vmem:[%s472 + $0x108] sm:$0xff]
        %v792 = vld [vmem:[%s472 + $0x110] sm:$0xff]
        %v793 = vld [vmem:[%s472 + $0x118] sm:$0xff]
        %v794 = vld [vmem:[%s472 + $0x120] sm:$0xff]
        %v795 = vld [vmem:[%s472 + $0x128] sm:$0xff]
        %v796 = vld [vmem:[%s472 + $0x130] sm:$0xff]
        %v797 = vld [vmem:[%s472 + $0x138] sm:$0xff]
        %v798 = vld [vmem:[%s472 + $0x140] sm:$0xff]
        %v799 = vld [vmem:[%s472 + $0x148] sm:$0xff]
        %v800 = vld [vmem:[%s472 + $0x150] sm:$0xff]
        %v801 = vld [vmem:[%s472 + $0x158] sm:$0xff]
        %v802 = vld [vmem:[%s472 + $0x160] sm:$0xff]
        %v803 = vld [vmem:[%s472 + $0x168] sm:$0xff]
        %v804 = vld [vmem:[%s472 + $0x170] sm:$0xff]
        %v805 = vld [vmem:[%s472 + $0x178] sm:$0xff]
        %v806 = vld [vmem:[%s472 + $0x180] sm:$0xff]
        %v807 = vld [vmem:[%s472 + $0x188] sm:$0xff]
        %v808 = vld [vmem:[%s472 + $0x190] sm:$0xff]
        %v809 = vld [vmem:[%s472 + $0x198] sm:$0xff]
        %v810 = vld [vmem:[%s472 + $0x1a0] sm:$0xff]
        %v811 = vld [vmem:[%s472 + $0x1a8] sm:$0xff]
        %v812 = vld [vmem:[%s472 + $0x1b0] sm:$0xff]
        %v813 = vld [vmem:[%s472 + $0x1b8] sm:$0xff]
        %v814 = vld [vmem:[%s472 + $0x1c0] sm:$0xff]
        %v815 = vld [vmem:[%s472 + $0x1c8] sm:$0xff]
        %v816 = vld [vmem:[%s472 + $0x1d0] sm:$0xff]
        %v817 = vld [vmem:[%s472 + $0x1d8] sm:$0xff]
        %v818 = vld [vmem:[%s472 + $0x1e0] sm:$0xff]
        %v819 = vld [vmem:[%s472 + $0x1e8] sm:$0xff]
        %v820 = vld [vmem:[%s472 + $0x1f0] sm:$0xff]
        %v821 = vld [vmem:[%s472 + $0x1f8] sm:$0xff]
        %v822 = vld [vmem:[%s472 + $0x200] sm:$0xff]
        %v823 = vld [vmem:[%s472 + $0x208] sm:$0xff]
        %v824 = vld [vmem:[%s472 + $0x210] sm:$0xff]
        %v825 = vld [vmem:[%s472 + $0x218] sm:$0xff]
        %v826 = vld [vmem:[%s472 + $0x220] sm:$0xff]
        %v827 = vld [vmem:[%s472 + $0x228] sm:$0xff]
        %v828 = vld [vmem:[%s472 + $0x230] sm:$0xff]
        %v829 = vld [vmem:[%s472 + $0x238] sm:$0xff]
        %v830 = vld [vmem:[%s472 + $0x240] sm:$0xff]
        %v831 = vld [vmem:[%s472 + $0x248] sm:$0xff]
        %v832 = vld [vmem:[%s472 + $0x250] sm:$0xff]
        %v833 = vld [vmem:[%s472 + $0x258] sm:$0xff]
        %v834 = vld [vmem:[%s472 + $0x260] sm:$0xff]
        %v835 = vld [vmem:[%s472 + $0x268] sm:$0xff]
        %v836 = vld [vmem:[%s472 + $0x270] sm:$0xff]
        %v837 = vld [vmem:[%s472 + $0x278] sm:$0xff]
        %v838 = vld [vmem:[%s472 + $0x280] sm:$0xff]
        %v839 = vld [vmem:[%s472 + $0x288] sm:$0xff]
        %v840 = vld [vmem:[%s472 + $0x290] sm:$0xff]
        %v841 = vld [vmem:[%s472 + $0x298] sm:$0xff]
        %v842 = vld [vmem:[%s472 + $0x2a0] sm:$0xff]
        %v843 = vld [vmem:[%s472 + $0x2a8] sm:$0xff]
        %v844 = vld [vmem:[%s472 + $0x2b0] sm:$0xff]
        %v845 = vld [vmem:[%s472 + $0x2b8] sm:$0xff]
        %v846 = vld [vmem:[%s472 + $0x2c0] sm:$0xff]
        %v847 = vld [vmem:[%s472 + $0x2c8] sm:$0xff]
        %v848 = vld [vmem:[%s472 + $0x2d0] sm:$0xff]
        %v849 = vld [vmem:[%s472 + $0x2d8] sm:$0xff]
        %v850 = vld [vmem:[%s472 + $0x2e0] sm:$0xff]
        %v851 = vld [vmem:[%s472 + $0x2e8] sm:$0xff]
        %v852 = vld [vmem:[%s472 + $0x2f0] sm:$0xff]
        %v853 = vld [vmem:[%s472 + $0x2f8] sm:$0xff]
        %v854 = vld [vmem:[%s472 + $0x300] sm:$0xff]
        %v855 = vld [vmem:[%s472 + $0x308] sm:$0xff]
        %v856 = vld [vmem:[%s472 + $0x310] sm:$0xff]
        %v857 = vld [vmem:[%s472 + $0x318] sm:$0xff]
        %v858 = vld [vmem:[%s472 + $0x320] sm:$0xff]
        %v859 = vld [vmem:[%s472 + $0x328] sm:$0xff]
        %v860 = vld [vmem:[%s472 + $0x330] sm:$0xff]
        %v861 = vld [vmem:[%s472 + $0x338] sm:$0xff]
        %v862 = vld [vmem:[%s472 + $0x340] sm:$0xff]
        %v863 = vld [vmem:[%s472 + $0x348] sm:$0xff]
        %v864 = vld [vmem:[%s472 + $0x350] sm:$0xff]
        %v865 = vld [vmem:[%s472 + $0x358] sm:$0xff]
        %v866 = vld [vmem:[%s472 + $0x360] sm:$0xff]
        %v867 = vld [vmem:[%s472 + $0x368] sm:$0xff]
        %v868 = vld [vmem:[%s472 + $0x370] sm:$0xff]
        %v869 = vld [vmem:[%s472 + $0x378] sm:$0xff]
        %v870 = vld [vmem:[%s472 + $0x380] sm:$0xff]
        %v871 = vld [vmem:[%s472 + $0x388] sm:$0xff]
        %v872 = vld [vmem:[%s472 + $0x390] sm:$0xff]
        %v873 = vld [vmem:[%s472 + $0x398] sm:$0xff]
        %v874 = vld [vmem:[%s472 + $0x3a0] sm:$0xff]
        %v875 = vld [vmem:[%s472 + $0x3a8] sm:$0xff]
        %v876 = vld [vmem:[%s472 + $0x3b0] sm:$0xff]
        %v877 = vld [vmem:[%s472 + $0x3b8] sm:$0xff]
        %v878 = vld [vmem:[%s472 + $0x3c0] sm:$0xff]
        %v879 = vld [vmem:[%s472 + $0x3c8] sm:$0xff]
        %v880 = vld [vmem:[%s472 + $0x3d0] sm:$0xff]
        %v881 = vld [vmem:[%s472 + $0x3d8] sm:$0xff]
        %v882 = vld [vmem:[%s472 + $0x3e0] sm:$0xff]
        %v883 = vld [vmem:[%s472 + $0x3e8] sm:$0xff]
        %v884 = vld [vmem:[%s472 + $0x3f0] sm:$0xff]
        %v885 = vld [vmem:[%s472 + $0x3f8] sm:$0xff]
        %v886 = vcvt.s32.f32 0
        %v887 = vcvt.s32.f32 1
        %v888 = vcvt.s32.f32 2
        %v889 = vcvt.s32.f32 3
        %v890 = vcvt.s32.f32 4
        %v891 = vcvt.s32.f32 5
        %v892 = vcvt.s32.f32 6
        %v893 = vcvt.s32.f32 7
        %v894 = vcvt.s32.f32 8
        %v895 = vcvt.s32.f32 9
        %v896 = vcvt.s32.f32 10
        %v897 = vcvt.s32.f32 11
        %v898 = vcvt.s32.f32 12
        %v899 = vcvt.s32.f32 13
        %v900 = vcvt.s32.f32 14
        %v901 = vcvt.s32.f32 15
        %v902 = vmax.f32 %v750, 0.0
        %v903 = vmax.f32 %v751, 0.0
        %v904 = vmin.f32 %v902, 14.99
        %v905 = vmin.f32 %v903, 14.99
        %v906 = vmax.f32 %v758, %v762
        %v907 = vmax.f32 %v760, %v764
        %v908 = vmax.f32 %v906, %v766
        %v909 = vmax.f32 %v907, %v768
        %v910 = vmax.f32 %v908, %v770
        %v911 = vmax.f32 %v909, %v772
        %v912 = vmax.f32 %v910, %v774
        %v913 = vmax.f32 %v911, %v776
        %v914 = vmax.f32 %v912, %v778
        %v915 = vmax.f32 %v913, %v780
        %v916 = vmax.f32 %v914, %v782
        %v917 = vmax.f32 %v915, %v784
        %v918 = vmax.f32 %v916, %v786
        %v919 = vmax.f32 %v917, %v788
        %v920 = vmax.f32 %v918, %v919
        %v921 = vmax.f32 %v759, %v763
        %v922 = vmax.f32 %v761, %v765
        %v923 = vmax.f32 %v921, %v767
        %v924 = vmax.f32 %v922, %v769
        %v925 = vmax.f32 %v923, %v771
        %v926 = vmax.f32 %v924, %v773
        %v927 = vmax.f32 %v925, %v775
        %v928 = vmax.f32 %v926, %v777
        %v929 = vmax.f32 %v927, %v779
        %v930 = vmax.f32 %v928, %v781
        %v931 = vmax.f32 %v929, %v783
        %v932 = vmax.f32 %v930, %v785
        %v933 = vmax.f32 %v931, %v787
        %v934 = vmax.f32 %v932, %v789
        %v935 = vmax.f32 %v933, %v934
        %v936 = vsub.f32 %v758, %v920
        %v937 = vsub.f32 %v759, %v935
        %v938 = vsub.f32 %v760, %v920
        %v939 = vsub.f32 %v761, %v935
        %v940 = vsub.f32 %v762, %v920
        %v941 = vsub.f32 %v763, %v935
        %v942 = vsub.f32 %v764, %v920
        %v943 = vsub.f32 %v765, %v935
        %v944 = vsub.f32 %v766, %v920
        %v945 = vsub.f32 %v767, %v935
        %v946 = vsub.f32 %v768, %v920
        %v947 = vsub.f32 %v769, %v935
        %v948 = vsub.f32 %v770, %v920
        %v949 = vsub.f32 %v771, %v935
        %v950 = vsub.f32 %v772, %v920
        %v951 = vsub.f32 %v773, %v935
        %v952 = vsub.f32 %v774, %v920
        %v953 = vsub.f32 %v775, %v935
        %v954 = vsub.f32 %v776, %v920
        %v955 = vsub.f32 %v777, %v935
        %v956 = vsub.f32 %v778, %v920
        %v957 = vsub.f32 %v779, %v935
        %v958 = vsub.f32 %v780, %v920
        %v959 = vsub.f32 %v781, %v935
        %v960 = vsub.f32 %v782, %v920
        %v961 = vsub.f32 %v783, %v935
        %v962 = vsub.f32 %v784, %v920
        %v963 = vsub.f32 %v785, %v935
        %v964 = vsub.f32 %v786, %v920
        %v965 = vsub.f32 %v787, %v935
        %v966 = vsub.f32 %v788, %v920
        %v967 = vsub.f32 %v789, %v935
        %v968 = vmul.f32 %v936, 1.442695
        %v969 = vpow.pop %v968
        %v970 = vmul.f32 %v937, 1.442695
        %v971 = vpow.pop %v970
        %v972 = vmul.f32 %v938, 1.442695
        %v973 = vpow.pop %v972
        %v974 = vmul.f32 %v939, 1.442695
        %v975 = vpow.pop %v974
        %v976 = vmul.f32 %v940, 1.442695
        %v977 = vpow.pop %v976
        %v978 = vmul.f32 %v941, 1.442695
        %v979 = vpow.pop %v978
        %v980 = vmul.f32 %v942, 1.442695
        %v981 = vpow.pop %v980
        %v982 = vmul.f32 %v943, 1.442695
        %v983 = vpow.pop %v982
        %v984 = vmul.f32 %v944, 1.442695
        %v985 = vpow.pop %v984
        %v986 = vmul.f32 %v945, 1.442695
        %v987 = vpow.pop %v986
        %v988 = vmul.f32 %v946, 1.442695
        %v989 = vpow.pop %v988
        %v990 = vmul.f32 %v947, 1.442695
        %v991 = vpow.pop %v990
        %v992 = vmul.f32 %v948, 1.442695
        %v993 = vpow.pop %v992
        %v994 = vmul.f32 %v949, 1.442695
        %v995 = vpow.pop %v994
        %v996 = vmul.f32 %v950, 1.442695
        %v997 = vpow.pop %v996
        %v998 = vmul.f32 %v951, 1.442695
        %v999 = vpow.pop %v998
        %v1000 = vmul.f32 %v952, 1.442695
        %v1001 = vpow.pop %v1000
        %v1002 = vmul.f32 %v953, 1.442695
        %v1003 = vpow.pop %v1002
        %v1004 = vmul.f32 %v954, 1.442695
        %v1005 = vpow.pop %v1004
        %v1006 = vmul.f32 %v955, 1.442695
        %v1007 = vpow.pop %v1006
        %v1008 = vmul.f32 %v956, 1.442695
        %v1009 = vpow.pop %v1008
        %v1010 = vmul.f32 %v957, 1.442695
        %v1011 = vpow.pop %v1010
        %v1012 = vmul.f32 %v958, 1.442695
        %v1013 = vpow.pop %v1012
        %v1014 = vmul.f32 %v959, 1.442695
        %v1015 = vpow.pop %v1014
        %v1016 = vmul.f32 %v960, 1.442695
        %v1017 = vpow.pop %v1016
        %v1018 = vmul.f32 %v961, 1.442695
        %v1019 = vpow.pop %v1018
        %v1020 = vmul.f32 %v962, 1.442695
        %v1021 = vpow.pop %v1020
        %v1022 = vmul.f32 %v963, 1.442695
        %v1023 = vpow.pop %v1022
        %v1024 = vmul.f32 %v964, 1.442695
        %v1025 = vpow.pop %v1024
        %v1026 = vmul.f32 %v965, 1.442695
        %v1027 = vpow.pop %v1026
        %v1028 = vmul.f32 %v966, 1.442695
        %v1029 = vpow.pop %v1028
        %v1030 = vmul.f32 %v967, 1.442695
        %v1031 = vpow.pop %v1030
        %v1032 = vadd.f32 %v969, %v973
        %v1033 = vadd.f32 %v1032, %v977
        %v1034 = vadd.f32 %v1033, %v981
        %v1035 = vadd.f32 %v1034, %v985
        %v1036 = vadd.f32 %v1035, %v989
        %v1037 = vadd.f32 %v1036, %v993
        %v1038 = vadd.f32 %v1037, %v997
        %v1039 = vadd.f32 %v1038, %v1001
        %v1040 = vadd.f32 %v1039, %v1005
        %v1041 = vadd.f32 %v1040, %v1009
        %v1042 = vadd.f32 %v1041, %v1013
        %v1043 = vadd.f32 %v1042, %v1017
        %v1044 = vadd.f32 %v1043, %v1021
        %v1045 = vadd.f32 %v1044, %v1025
        %v1046 = vadd.f32 %v1045, %v1029
        %v1047 = vadd.f32 %v971, %v975
        %v1048 = vadd.f32 %v1047, %v979
        %v1049 = vadd.f32 %v1048, %v983
        %v1050 = vadd.f32 %v1049, %v987
        %v1051 = vadd.f32 %v1050, %v991
        %v1052 = vadd.f32 %v1051, %v995
        %v1053 = vadd.f32 %v1052, %v999
        %v1054 = vadd.f32 %v1053, %v1003
        %v1055 = vadd.f32 %v1054, %v1007
        %v1056 = vadd.f32 %v1055, %v1011
        %v1057 = vadd.f32 %v1056, %v1015
        %v1058 = vadd.f32 %v1057, %v1019
        %v1059 = vadd.f32 %v1058, %v1023
        %v1060 = vadd.f32 %v1059, %v1027
        %v1061 = vadd.f32 %v1060, %v1031
        %v1062 = vlog2.pop %v1046
        %v1063 = vmul.f32 %v1062, 0.6931472
        %v1064 = vlog2.pop %v1061
        %v1065 = vmul.f32 %v1064, 0.6931472
        %v1066 = vadd.f32 %v1063, %v920
        %v1067 = vadd.f32 %v1065, %v935
        %v1068 = vsub.f32 %v886, %v904
        %v1069 = vsub.f32 %v886, %v905
        %v1070 = vsub.f32 %v887, %v904
        %v1071 = vsub.f32 %v887, %v905
        %v1072 = vsub.f32 %v888, %v904
        %v1073 = vsub.f32 %v888, %v905
        %v1074 = vsub.f32 %v889, %v904
        %v1075 = vsub.f32 %v889, %v905
        %v1076 = vsub.f32 %v890, %v904
        %v1077 = vsub.f32 %v890, %v905
        %v1078 = vsub.f32 %v891, %v904
        %v1079 = vsub.f32 %v891, %v905
        %v1080 = vsub.f32 %v892, %v904
        %v1081 = vsub.f32 %v892, %v905
        %v1082 = vsub.f32 %v893, %v904
        %v1083 = vsub.f32 %v893, %v905
        %v1084 = vsub.f32 %v894, %v904
        %v1085 = vsub.f32 %v894, %v905
        %v1086 = vsub.f32 %v895, %v904
        %v1087 = vsub.f32 %v895, %v905
        %v1088 = vsub.f32 %v896, %v904
        %v1089 = vsub.f32 %v896, %v905
        %v1090 = vsub.f32 %v897, %v904
        %v1091 = vsub.f32 %v897, %v905
        %v1092 = vsub.f32 %v898, %v904
        %v1093 = vsub.f32 %v898, %v905
        %v1094 = vsub.f32 %v899, %v904
        %v1095 = vsub.f32 %v899, %v905
        %v1096 = vsub.f32 %v900, %v904
        %v1097 = vsub.f32 %v900, %v905
        %v1098 = vsub.f32 %v901, %v904
        %v1099 = vsub.f32 %v901, %v905
        %v1100 = vand.u32 2147483647, %v1068
        %v1101 = vand.u32 2147483647, %v1069
        %v1102 = vand.u32 2147483647, %v1070
        %v1103 = vand.u32 2147483647, %v1071
        %v1104 = vand.u32 2147483647, %v1072
        %v1105 = vand.u32 2147483647, %v1073
        %v1106 = vand.u32 2147483647, %v1074
        %v1107 = vand.u32 2147483647, %v1075
        %v1108 = vand.u32 2147483647, %v1076
        %v1109 = vand.u32 2147483647, %v1077
        %v1110 = vand.u32 2147483647, %v1078
        %v1111 = vand.u32 2147483647, %v1079
        %v1112 = vand.u32 2147483647, %v1080
        %v1113 = vand.u32 2147483647, %v1081
        %v1114 = vand.u32 2147483647, %v1082
        %v1115 = vand.u32 2147483647, %v1083
        %v1116 = vand.u32 2147483647, %v1084
        %v1117 = vand.u32 2147483647, %v1085
        %v1118 = vand.u32 2147483647, %v1086
        %v1119 = vand.u32 2147483647, %v1087
        %v1120 = vand.u32 2147483647, %v1088
        %v1121 = vand.u32 2147483647, %v1089
        %v1122 = vand.u32 2147483647, %v1090
        %v1123 = vand.u32 2147483647, %v1091
        %v1124 = vand.u32 2147483647, %v1092
        %v1125 = vand.u32 2147483647, %v1093
        %v1126 = vand.u32 2147483647, %v1094
        %v1127 = vand.u32 2147483647, %v1095
        %v1128 = vand.u32 2147483647, %v1096
        %v1129 = vand.u32 2147483647, %v1097
        %v1130 = vand.u32 2147483647, %v1098
        %v1131 = vand.u32 2147483647, %v1099
        %v1132 = vsub.f32 1.0, %v1100
        %v1133 = vsub.f32 1.0, %v1101
        %v1134 = vsub.f32 1.0, %v1102
        %v1135 = vsub.f32 1.0, %v1103
        %v1136 = vsub.f32 1.0, %v1104
        %v1137 = vsub.f32 1.0, %v1105
        %v1138 = vsub.f32 1.0, %v1106
        %v1139 = vsub.f32 1.0, %v1107
        %v1140 = vsub.f32 1.0, %v1108
        %v1141 = vsub.f32 1.0, %v1109
        %v1142 = vsub.f32 1.0, %v1110
        %v1143 = vsub.f32 1.0, %v1111
        %v1144 = vsub.f32 1.0, %v1112
        %v1145 = vsub.f32 1.0, %v1113
        %v1146 = vsub.f32 1.0, %v1114
        %v1147 = vsub.f32 1.0, %v1115
        %v1148 = vsub.f32 1.0, %v1116
        %v1149 = vsub.f32 1.0, %v1117
        %v1150 = vsub.f32 1.0, %v1118
        %v1151 = vsub.f32 1.0, %v1119
        %v1152 = vsub.f32 1.0, %v1120
        %v1153 = vsub.f32 1.0, %v1121
        %v1154 = vsub.f32 1.0, %v1122
        %v1155 = vsub.f32 1.0, %v1123
        %v1156 = vsub.f32 1.0, %v1124
        %v1157 = vsub.f32 1.0, %v1125
        %v1158 = vsub.f32 1.0, %v1126
        %v1159 = vsub.f32 1.0, %v1127
        %v1160 = vsub.f32 1.0, %v1128
        %v1161 = vsub.f32 1.0, %v1129
        %v1162 = vsub.f32 1.0, %v1130
        %v1163 = vsub.f32 1.0, %v1131
        %v1164 = vmax.f32 %v1132, 0.0
        %v1165 = vmax.f32 %v1133, 0.0
        %v1166 = vmax.f32 %v1134, 0.0
        %v1167 = vmax.f32 %v1135, 0.0
        %v1168 = vmax.f32 %v1136, 0.0
        %v1169 = vmax.f32 %v1137, 0.0
        %v1170 = vmax.f32 %v1138, 0.0
        %v1171 = vmax.f32 %v1139, 0.0
        %v1172 = vmax.f32 %v1140, 0.0
        %v1173 = vmax.f32 %v1141, 0.0
        %v1174 = vmax.f32 %v1142, 0.0
        %v1175 = vmax.f32 %v1143, 0.0
        %v1176 = vmax.f32 %v1144, 0.0
        %v1177 = vmax.f32 %v1145, 0.0
        %v1178 = vmax.f32 %v1146, 0.0
        %v1179 = vmax.f32 %v1147, 0.0
        %v1180 = vmax.f32 %v1148, 0.0
        %v1181 = vmax.f32 %v1149, 0.0
        %v1182 = vmax.f32 %v1150, 0.0
        %v1183 = vmax.f32 %v1151, 0.0
        %v1184 = vmax.f32 %v1152, 0.0
        %v1185 = vmax.f32 %v1153, 0.0
        %v1186 = vmax.f32 %v1154, 0.0
        %v1187 = vmax.f32 %v1155, 0.0
        %v1188 = vmax.f32 %v1156, 0.0
        %v1189 = vmax.f32 %v1157, 0.0
        %v1190 = vmax.f32 %v1158, 0.0
        %v1191 = vmax.f32 %v1159, 0.0
        %v1192 = vmax.f32 %v1160, 0.0
        %v1193 = vmax.f32 %v1161, 0.0
        %v1194 = vmax.f32 %v1162, 0.0
        %v1195 = vmax.f32 %v1163, 0.0
        %v1196 = vmul.f32 %v1164, %v758
        %v1197 = vmul.f32 %v1165, %v759
        %v1198 = vmul.f32 %v1166, %v760
        %v1199 = vmul.f32 %v1167, %v761
        %v1200 = vmul.f32 %v1168, %v762
        %v1201 = vmul.f32 %v1169, %v763
        %v1202 = vmul.f32 %v1170, %v764
        %v1203 = vmul.f32 %v1171, %v765
        %v1204 = vmul.f32 %v1172, %v766
        %v1205 = vmul.f32 %v1173, %v767
        %v1206 = vmul.f32 %v1174, %v768
        %v1207 = vmul.f32 %v1175, %v769
        %v1208 = vmul.f32 %v1176, %v770
        %v1209 = vmul.f32 %v1177, %v771
        %v1210 = vmul.f32 %v1178, %v772
        %v1211 = vmul.f32 %v1179, %v773
        %v1212 = vmul.f32 %v1180, %v774
        %v1213 = vmul.f32 %v1181, %v775
        %v1214 = vmul.f32 %v1182, %v776
        %v1215 = vmul.f32 %v1183, %v777
        %v1216 = vmul.f32 %v1184, %v778
        %v1217 = vmul.f32 %v1185, %v779
        %v1218 = vmul.f32 %v1186, %v780
        %v1219 = vmul.f32 %v1187, %v781
        %v1220 = vmul.f32 %v1188, %v782
        %v1221 = vmul.f32 %v1189, %v783
        %v1222 = vmul.f32 %v1190, %v784
        %v1223 = vmul.f32 %v1191, %v785
        %v1224 = vmul.f32 %v1192, %v786
        %v1225 = vmul.f32 %v1193, %v787
        %v1226 = vmul.f32 %v1194, %v788
        %v1227 = vmul.f32 %v1195, %v789
        %v1228 = vadd.f32 %v1196, %v1198
        %v1229 = vadd.f32 %v1228, %v1200
        %v1230 = vadd.f32 %v1229, %v1202
        %v1231 = vadd.f32 %v1230, %v1204
        %v1232 = vadd.f32 %v1231, %v1206
        %v1233 = vadd.f32 %v1232, %v1208
        %v1234 = vadd.f32 %v1233, %v1210
        %v1235 = vadd.f32 %v1234, %v1212
        %v1236 = vadd.f32 %v1235, %v1214
        %v1237 = vadd.f32 %v1236, %v1216
        %v1238 = vadd.f32 %v1237, %v1218
        %v1239 = vadd.f32 %v1238, %v1220
        %v1240 = vadd.f32 %v1239, %v1222
        %v1241 = vadd.f32 %v1240, %v1224
        %v1242 = vadd.f32 %v1241, %v1226
        %v1243 = vadd.f32 %v1197, %v1199
        %v1244 = vadd.f32 %v1243, %v1201
        %v1245 = vadd.f32 %v1244, %v1203
        %v1246 = vadd.f32 %v1245, %v1205
        %v1247 = vadd.f32 %v1246, %v1207
        %v1248 = vadd.f32 %v1247, %v1209
        %v1249 = vadd.f32 %v1248, %v1211
        %v1250 = vadd.f32 %v1249, %v1213
        %v1251 = vadd.f32 %v1250, %v1215
        %v1252 = vadd.f32 %v1251, %v1217
        %v1253 = vadd.f32 %v1252, %v1219
        %v1254 = vadd.f32 %v1253, %v1221
        %v1255 = vadd.f32 %v1254, %v1223
        %v1256 = vadd.f32 %v1255, %v1225
        %v1257 = vadd.f32 %v1256, %v1227
        %v1258 = vsub.f32 %v1066, %v1242
        %v1259 = vsub.f32 %v1067, %v1257
        %v1260 = vadd.f32 %v1258, 0.0
        %v1261 = vadd.f32 %v1259, 0.0
        %v1262 = vmax.f32 %v752, 0.0
        %v1263 = vmax.f32 %v753, 0.0
        %v1264 = vmin.f32 %v1262, 14.99
        %v1265 = vmin.f32 %v1263, 14.99
        %v1266 = vmax.f32 %v790, %v794
        %v1267 = vmax.f32 %v792, %v796
        %v1268 = vmax.f32 %v1266, %v798
        %v1269 = vmax.f32 %v1267, %v800
        %v1270 = vmax.f32 %v1268, %v802
        %v1271 = vmax.f32 %v1269, %v804
        %v1272 = vmax.f32 %v1270, %v806
        %v1273 = vmax.f32 %v1271, %v808
        %v1274 = vmax.f32 %v1272, %v810
        %v1275 = vmax.f32 %v1273, %v812
        %v1276 = vmax.f32 %v1274, %v814
        %v1277 = vmax.f32 %v1275, %v816
        %v1278 = vmax.f32 %v1276, %v818
        %v1279 = vmax.f32 %v1277, %v820
        %v1280 = vmax.f32 %v1278, %v1279
        %v1281 = vmax.f32 %v791, %v795
        %v1282 = vmax.f32 %v793, %v797
        %v1283 = vmax.f32 %v1281, %v799
        %v1284 = vmax.f32 %v1282, %v801
        %v1285 = vmax.f32 %v1283, %v803
        %v1286 = vmax.f32 %v1284, %v805
        %v1287 = vmax.f32 %v1285, %v807
        %v1288 = vmax.f32 %v1286, %v809
        %v1289 = vmax.f32 %v1287, %v811
        %v1290 = vmax.f32 %v1288, %v813
        %v1291 = vmax.f32 %v1289, %v815
        %v1292 = vmax.f32 %v1290, %v817
        %v1293 = vmax.f32 %v1291, %v819
        %v1294 = vmax.f32 %v1292, %v821
        %v1295 = vmax.f32 %v1293, %v1294
        %v1296 = vsub.f32 %v790, %v1280
        %v1297 = vsub.f32 %v791, %v1295
        %v1298 = vsub.f32 %v792, %v1280
        %v1299 = vsub.f32 %v793, %v1295
        %v1300 = vsub.f32 %v794, %v1280
        %v1301 = vsub.f32 %v795, %v1295
        %v1302 = vsub.f32 %v796, %v1280
        %v1303 = vsub.f32 %v797, %v1295
        %v1304 = vsub.f32 %v798, %v1280
        %v1305 = vsub.f32 %v799, %v1295
        %v1306 = vsub.f32 %v800, %v1280
        %v1307 = vsub.f32 %v801, %v1295
        %v1308 = vsub.f32 %v802, %v1280
        %v1309 = vsub.f32 %v803, %v1295
        %v1310 = vsub.f32 %v804, %v1280
        %v1311 = vsub.f32 %v805, %v1295
        %v1312 = vsub.f32 %v806, %v1280
        %v1313 = vsub.f32 %v807, %v1295
        %v1314 = vsub.f32 %v808, %v1280
        %v1315 = vsub.f32 %v809, %v1295
        %v1316 = vsub.f32 %v810, %v1280
        %v1317 = vsub.f32 %v811, %v1295
        %v1318 = vsub.f32 %v812, %v1280
        %v1319 = vsub.f32 %v813, %v1295
        %v1320 = vsub.f32 %v814, %v1280
        %v1321 = vsub.f32 %v815, %v1295
        %v1322 = vsub.f32 %v816, %v1280
        %v1323 = vsub.f32 %v817, %v1295
        %v1324 = vsub.f32 %v818, %v1280
        %v1325 = vsub.f32 %v819, %v1295
        %v1326 = vsub.f32 %v820, %v1280
        %v1327 = vsub.f32 %v821, %v1295
        %v1328 = vmul.f32 %v1296, 1.442695
        %v1329 = vpow.pop %v1328
        %v1330 = vmul.f32 %v1297, 1.442695
        %v1331 = vpow.pop %v1330
        %v1332 = vmul.f32 %v1298, 1.442695
        %v1333 = vpow.pop %v1332
        %v1334 = vmul.f32 %v1299, 1.442695
        %v1335 = vpow.pop %v1334
        %v1336 = vmul.f32 %v1300, 1.442695
        %v1337 = vpow.pop %v1336
        %v1338 = vmul.f32 %v1301, 1.442695
        %v1339 = vpow.pop %v1338
        %v1340 = vmul.f32 %v1302, 1.442695
        %v1341 = vpow.pop %v1340
        %v1342 = vmul.f32 %v1303, 1.442695
        %v1343 = vpow.pop %v1342
        %v1344 = vmul.f32 %v1304, 1.442695
        %v1345 = vpow.pop %v1344
        %v1346 = vmul.f32 %v1305, 1.442695
        %v1347 = vpow.pop %v1346
        %v1348 = vmul.f32 %v1306, 1.442695
        %v1349 = vpow.pop %v1348
        %v1350 = vmul.f32 %v1307, 1.442695
        %v1351 = vpow.pop %v1350
        %v1352 = vmul.f32 %v1308, 1.442695
        %v1353 = vpow.pop %v1352
        %v1354 = vmul.f32 %v1309, 1.442695
        %v1355 = vpow.pop %v1354
        %v1356 = vmul.f32 %v1310, 1.442695
        %v1357 = vpow.pop %v1356
        %v1358 = vmul.f32 %v1311, 1.442695
        %v1359 = vpow.pop %v1358
        %v1360 = vmul.f32 %v1312, 1.442695
        %v1361 = vpow.pop %v1360
        %v1362 = vmul.f32 %v1313, 1.442695
        %v1363 = vpow.pop %v1362
        %v1364 = vmul.f32 %v1314, 1.442695
        %v1365 = vpow.pop %v1364
        %v1366 = vmul.f32 %v1315, 1.442695
        %v1367 = vpow.pop %v1366
        %v1368 = vmul.f32 %v1316, 1.442695
        %v1369 = vpow.pop %v1368
        %v1370 = vmul.f32 %v1317, 1.442695
        %v1371 = vpow.pop %v1370
        %v1372 = vmul.f32 %v1318, 1.442695
        %v1373 = vpow.pop %v1372
        %v1374 = vmul.f32 %v1319, 1.442695
        %v1375 = vpow.pop %v1374
        %v1376 = vmul.f32 %v1320, 1.442695
        %v1377 = vpow.pop %v1376
        %v1378 = vmul.f32 %v1321, 1.442695
        %v1379 = vpow.pop %v1378
        %v1380 = vmul.f32 %v1322, 1.442695
        %v1381 = vpow.pop %v1380
        %v1382 = vmul.f32 %v1323, 1.442695
        %v1383 = vpow.pop %v1382
        %v1384 = vmul.f32 %v1324, 1.442695
        %v1385 = vpow.pop %v1384
        %v1386 = vmul.f32 %v1325, 1.442695
        %v1387 = vpow.pop %v1386
        %v1388 = vmul.f32 %v1326, 1.442695
        %v1389 = vpow.pop %v1388
        %v1390 = vmul.f32 %v1327, 1.442695
        %v1391 = vpow.pop %v1390
        %v1392 = vadd.f32 %v1329, %v1333
        %v1393 = vadd.f32 %v1392, %v1337
        %v1394 = vadd.f32 %v1393, %v1341
        %v1395 = vadd.f32 %v1394, %v1345
        %v1396 = vadd.f32 %v1395, %v1349
        %v1397 = vadd.f32 %v1396, %v1353
        %v1398 = vadd.f32 %v1397, %v1357
        %v1399 = vadd.f32 %v1398, %v1361
        %v1400 = vadd.f32 %v1399, %v1365
        %v1401 = vadd.f32 %v1400, %v1369
        %v1402 = vadd.f32 %v1401, %v1373
        %v1403 = vadd.f32 %v1402, %v1377
        %v1404 = vadd.f32 %v1403, %v1381
        %v1405 = vadd.f32 %v1404, %v1385
        %v1406 = vadd.f32 %v1405, %v1389
        %v1407 = vadd.f32 %v1331, %v1335
        %v1408 = vadd.f32 %v1407, %v1339
        %v1409 = vadd.f32 %v1408, %v1343
        %v1410 = vadd.f32 %v1409, %v1347
        %v1411 = vadd.f32 %v1410, %v1351
        %v1412 = vadd.f32 %v1411, %v1355
        %v1413 = vadd.f32 %v1412, %v1359
        %v1414 = vadd.f32 %v1413, %v1363
        %v1415 = vadd.f32 %v1414, %v1367
        %v1416 = vadd.f32 %v1415, %v1371
        %v1417 = vadd.f32 %v1416, %v1375
        %v1418 = vadd.f32 %v1417, %v1379
        %v1419 = vadd.f32 %v1418, %v1383
        %v1420 = vadd.f32 %v1419, %v1387
        %v1421 = vadd.f32 %v1420, %v1391
        %v1422 = vlog2.pop %v1406
        %v1423 = vmul.f32 %v1422, 0.6931472
        %v1424 = vlog2.pop %v1421
        %v1425 = vmul.f32 %v1424, 0.6931472
        %v1426 = vadd.f32 %v1423, %v1280
        %v1427 = vadd.f32 %v1425, %v1295
        %v1428 = vsub.f32 %v886, %v1264
        %v1429 = vsub.f32 %v886, %v1265
        %v1430 = vsub.f32 %v887, %v1264
        %v1431 = vsub.f32 %v887, %v1265
        %v1432 = vsub.f32 %v888, %v1264
        %v1433 = vsub.f32 %v888, %v1265
        %v1434 = vsub.f32 %v889, %v1264
        %v1435 = vsub.f32 %v889, %v1265
        %v1436 = vsub.f32 %v890, %v1264
        %v1437 = vsub.f32 %v890, %v1265
        %v1438 = vsub.f32 %v891, %v1264
        %v1439 = vsub.f32 %v891, %v1265
        %v1440 = vsub.f32 %v892, %v1264
        %v1441 = vsub.f32 %v892, %v1265
        %v1442 = vsub.f32 %v893, %v1264
        %v1443 = vsub.f32 %v893, %v1265
        %v1444 = vsub.f32 %v894, %v1264
        %v1445 = vsub.f32 %v894, %v1265
        %v1446 = vsub.f32 %v895, %v1264
        %v1447 = vsub.f32 %v895, %v1265
        %v1448 = vsub.f32 %v896, %v1264
        %v1449 = vsub.f32 %v896, %v1265
        %v1450 = vsub.f32 %v897, %v1264
        %v1451 = vsub.f32 %v897, %v1265
        %v1452 = vsub.f32 %v898, %v1264
        %v1453 = vsub.f32 %v898, %v1265
        %v1454 = vsub.f32 %v899, %v1264
        %v1455 = vsub.f32 %v899, %v1265
        %v1456 = vsub.f32 %v900, %v1264
        %v1457 = vsub.f32 %v900, %v1265
        %v1458 = vsub.f32 %v901, %v1264
        %v1459 = vsub.f32 %v901, %v1265
        %v1460 = vand.u32 2147483647, %v1428
        %v1461 = vand.u32 2147483647, %v1429
        %v1462 = vand.u32 2147483647, %v1430
        %v1463 = vand.u32 2147483647, %v1431
        %v1464 = vand.u32 2147483647, %v1432
        %v1465 = vand.u32 2147483647, %v1433
        %v1466 = vand.u32 2147483647, %v1434
        %v1467 = vand.u32 2147483647, %v1435
        %v1468 = vand.u32 2147483647, %v1436
        %v1469 = vand.u32 2147483647, %v1437
        %v1470 = vand.u32 2147483647, %v1438
        %v1471 = vand.u32 2147483647, %v1439
        %v1472 = vand.u32 2147483647, %v1440
        %v1473 = vand.u32 2147483647, %v1441
        %v1474 = vand.u32 2147483647, %v1442
        %v1475 = vand.u32 2147483647, %v1443
        %v1476 = vand.u32 2147483647, %v1444
        %v1477 = vand.u32 2147483647, %v1445
        %v1478 = vand.u32 2147483647, %v1446
        %v1479 = vand.u32 2147483647, %v1447
        %v1480 = vand.u32 2147483647, %v1448
        %v1481 = vand.u32 2147483647, %v1449
        %v1482 = vand.u32 2147483647, %v1450
        %v1483 = vand.u32 2147483647, %v1451
        %v1484 = vand.u32 2147483647, %v1452
        %v1485 = vand.u32 2147483647, %v1453
        %v1486 = vand.u32 2147483647, %v1454
        %v1487 = vand.u32 2147483647, %v1455
        %v1488 = vand.u32 2147483647, %v1456
        %v1489 = vand.u32 2147483647, %v1457
        %v1490 = vand.u32 2147483647, %v1458
        %v1491 = vand.u32 2147483647, %v1459
        %v1492 = vsub.f32 1.0, %v1460
        %v1493 = vsub.f32 1.0, %v1461
        %v1494 = vsub.f32 1.0, %v1462
        %v1495 = vsub.f32 1.0, %v1463
        %v1496 = vsub.f32 1.0, %v1464
        %v1497 = vsub.f32 1.0, %v1465
        %v1498 = vsub.f32 1.0, %v1466
        %v1499 = vsub.f32 1.0, %v1467
        %v1500 = vsub.f32 1.0, %v1468
        %v1501 = vsub.f32 1.0, %v1469
        %v1502 = vsub.f32 1.0, %v1470
        %v1503 = vsub.f32 1.0, %v1471
        %v1504 = vsub.f32 1.0, %v1472
        %v1505 = vsub.f32 1.0, %v1473
        %v1506 = vsub.f32 1.0, %v1474
        %v1507 = vsub.f32 1.0, %v1475
        %v1508 = vsub.f32 1.0, %v1476
        %v1509 = vsub.f32 1.0, %v1477
        %v1510 = vsub.f32 1.0, %v1478
        %v1511 = vsub.f32 1.0, %v1479
        %v1512 = vsub.f32 1.0, %v1480
        %v1513 = vsub.f32 1.0, %v1481
        %v1514 = vsub.f32 1.0, %v1482
        %v1515 = vsub.f32 1.0, %v1483
        %v1516 = vsub.f32 1.0, %v1484
        %v1517 = vsub.f32 1.0, %v1485
        %v1518 = vsub.f32 1.0, %v1486
        %v1519 = vsub.f32 1.0, %v1487
        %v1520 = vsub.f32 1.0, %v1488
        %v1521 = vsub.f32 1.0, %v1489
        %v1522 = vsub.f32 1.0, %v1490
        %v1523 = vsub.f32 1.0, %v1491
        %v1524 = vmax.f32 %v1492, 0.0
        %v1525 = vmax.f32 %v1493, 0.0
        %v1526 = vmax.f32 %v1494, 0.0
        %v1527 = vmax.f32 %v1495, 0.0
        %v1528 = vmax.f32 %v1496, 0.0
        %v1529 = vmax.f32 %v1497, 0.0
        %v1530 = vmax.f32 %v1498, 0.0
        %v1531 = vmax.f32 %v1499, 0.0
        %v1532 = vmax.f32 %v1500, 0.0
        %v1533 = vmax.f32 %v1501, 0.0
        %v1534 = vmax.f32 %v1502, 0.0
        %v1535 = vmax.f32 %v1503, 0.0
        %v1536 = vmax.f32 %v1504, 0.0
        %v1537 = vmax.f32 %v1505, 0.0
        %v1538 = vmax.f32 %v1506, 0.0
        %v1539 = vmax.f32 %v1507, 0.0
        %v1540 = vmax.f32 %v1508, 0.0
        %v1541 = vmax.f32 %v1509, 0.0
        %v1542 = vmax.f32 %v1510, 0.0
        %v1543 = vmax.f32 %v1511, 0.0
        %v1544 = vmax.f32 %v1512, 0.0
        %v1545 = vmax.f32 %v1513, 0.0
        %v1546 = vmax.f32 %v1514, 0.0
        %v1547 = vmax.f32 %v1515, 0.0
        %v1548 = vmax.f32 %v1516, 0.0
        %v1549 = vmax.f32 %v1517, 0.0
        %v1550 = vmax.f32 %v1518, 0.0
        %v1551 = vmax.f32 %v1519, 0.0
        %v1552 = vmax.f32 %v1520, 0.0
        %v1553 = vmax.f32 %v1521, 0.0
        %v1554 = vmax.f32 %v1522, 0.0
        %v1555 = vmax.f32 %v1523, 0.0
        %v1556 = vmul.f32 %v1524, %v790
        %v1557 = vmul.f32 %v1525, %v791
        %v1558 = vmul.f32 %v1526, %v792
        %v1559 = vmul.f32 %v1527, %v793
        %v1560 = vmul.f32 %v1528, %v794
        %v1561 = vmul.f32 %v1529, %v795
        %v1562 = vmul.f32 %v1530, %v796
        %v1563 = vmul.f32 %v1531, %v797
        %v1564 = vmul.f32 %v1532, %v798
        %v1565 = vmul.f32 %v1533, %v799
        %v1566 = vmul.f32 %v1534, %v800
        %v1567 = vmul.f32 %v1535, %v801
        %v1568 = vmul.f32 %v1536, %v802
        %v1569 = vmul.f32 %v1537, %v803
        %v1570 = vmul.f32 %v1538, %v804
        %v1571 = vmul.f32 %v1539, %v805
        %v1572 = vmul.f32 %v1540, %v806
        %v1573 = vmul.f32 %v1541, %v807
        %v1574 = vmul.f32 %v1542, %v808
        %v1575 = vmul.f32 %v1543, %v809
        %v1576 = vmul.f32 %v1544, %v810
        %v1577 = vmul.f32 %v1545, %v811
        %v1578 = vmul.f32 %v1546, %v812
        %v1579 = vmul.f32 %v1547, %v813
        %v1580 = vmul.f32 %v1548, %v814
        %v1581 = vmul.f32 %v1549, %v815
        %v1582 = vmul.f32 %v1550, %v816
        %v1583 = vmul.f32 %v1551, %v817
        %v1584 = vmul.f32 %v1552, %v818
        %v1585 = vmul.f32 %v1553, %v819
        %v1586 = vmul.f32 %v1554, %v820
        %v1587 = vmul.f32 %v1555, %v821
        %v1588 = vadd.f32 %v1556, %v1558
        %v1589 = vadd.f32 %v1588, %v1560
        %v1590 = vadd.f32 %v1589, %v1562
        %v1591 = vadd.f32 %v1590, %v1564
        %v1592 = vadd.f32 %v1591, %v1566
        %v1593 = vadd.f32 %v1592, %v1568
        %v1594 = vadd.f32 %v1593, %v1570
        %v1595 = vadd.f32 %v1594, %v1572
        %v1596 = vadd.f32 %v1595, %v1574
        %v1597 = vadd.f32 %v1596, %v1576
        %v1598 = vadd.f32 %v1597, %v1578
        %v1599 = vadd.f32 %v1598, %v1580
        %v1600 = vadd.f32 %v1599, %v1582
        %v1601 = vadd.f32 %v1600, %v1584
        %v1602 = vadd.f32 %v1601, %v1586
        %v1603 = vadd.f32 %v1557, %v1559
        %v1604 = vadd.f32 %v1603, %v1561
        %v1605 = vadd.f32 %v1604, %v1563
        %v1606 = vadd.f32 %v1605, %v1565
        %v1607 = vadd.f32 %v1606, %v1567
        %v1608 = vadd.f32 %v1607, %v1569
        %v1609 = vadd.f32 %v1608, %v1571
        %v1610 = vadd.f32 %v1609, %v1573
        %v1611 = vadd.f32 %v1610, %v1575
        %v1612 = vadd.f32 %v1611, %v1577
        %v1613 = vadd.f32 %v1612, %v1579
        %v1614 = vadd.f32 %v1613, %v1581
        %v1615 = vadd.f32 %v1614, %v1583
        %v1616 = vadd.f32 %v1615, %v1585
        %v1617 = vadd.f32 %v1616, %v1587
        %v1618 = vsub.f32 %v1426, %v1602
        %v1619 = vsub.f32 %v1427, %v1617
        %v1620 = vadd.f32 %v1260, %v1618
        %v1621 = vadd.f32 %v1261, %v1619
        %v1622 = vmax.f32 %v754, 0.0
        %v1623 = vmax.f32 %v755, 0.0
        %v1624 = vmin.f32 %v1622, 14.99
        %v1625 = vmin.f32 %v1623, 14.99
        %v1626 = vmax.f32 %v822, %v826
        %v1627 = vmax.f32 %v824, %v828
        %v1628 = vmax.f32 %v1626, %v830
        %v1629 = vmax.f32 %v1627, %v832
        %v1630 = vmax.f32 %v1628, %v834
        %v1631 = vmax.f32 %v1629, %v836
        %v1632 = vmax.f32 %v1630, %v838
        %v1633 = vmax.f32 %v1631, %v840
        %v1634 = vmax.f32 %v1632, %v842
        %v1635 = vmax.f32 %v1633, %v844
        %v1636 = vmax.f32 %v1634, %v846
        %v1637 = vmax.f32 %v1635, %v848
        %v1638 = vmax.f32 %v1636, %v850
        %v1639 = vmax.f32 %v1637, %v852
        %v1640 = vmax.f32 %v1638, %v1639
        %v1641 = vmax.f32 %v823, %v827
        %v1642 = vmax.f32 %v825, %v829
        %v1643 = vmax.f32 %v1641, %v831
        %v1644 = vmax.f32 %v1642, %v833
        %v1645 = vmax.f32 %v1643, %v835
        %v1646 = vmax.f32 %v1644, %v837
        %v1647 = vmax.f32 %v1645, %v839
        %v1648 = vmax.f32 %v1646, %v841
        %v1649 = vmax.f32 %v1647, %v843
        %v1650 = vmax.f32 %v1648, %v845
        %v1651 = vmax.f32 %v1649, %v847
        %v1652 = vmax.f32 %v1650, %v849
        %v1653 = vmax.f32 %v1651, %v851
        %v1654 = vmax.f32 %v1652, %v853
        %v1655 = vmax.f32 %v1653, %v1654
        %v1656 = vsub.f32 %v822, %v1640
        %v1657 = vsub.f32 %v823, %v1655
        %v1658 = vsub.f32 %v824, %v1640
        %v1659 = vsub.f32 %v825, %v1655
        %v1660 = vsub.f32 %v826, %v1640
        %v1661 = vsub.f32 %v827, %v1655
        %v1662 = vsub.f32 %v828, %v1640
        %v1663 = vsub.f32 %v829, %v1655
        %v1664 = vsub.f32 %v830, %v1640
        %v1665 = vsub.f32 %v831, %v1655
        %v1666 = vsub.f32 %v832, %v1640
        %v1667 = vsub.f32 %v833, %v1655
        %v1668 = vsub.f32 %v834, %v1640
        %v1669 = vsub.f32 %v835, %v1655
        %v1670 = vsub.f32 %v836, %v1640
        %v1671 = vsub.f32 %v837, %v1655
        %v1672 = vsub.f32 %v838, %v1640
        %v1673 = vsub.f32 %v839, %v1655
        %v1674 = vsub.f32 %v840, %v1640
        %v1675 = vsub.f32 %v841, %v1655
        %v1676 = vsub.f32 %v842, %v1640
        %v1677 = vsub.f32 %v843, %v1655
        %v1678 = vsub.f32 %v844, %v1640
        %v1679 = vsub.f32 %v845, %v1655
        %v1680 = vsub.f32 %v846, %v1640
        %v1681 = vsub.f32 %v847, %v1655
        %v1682 = vsub.f32 %v848, %v1640
        %v1683 = vsub.f32 %v849, %v1655
        %v1684 = vsub.f32 %v850, %v1640
        %v1685 = vsub.f32 %v851, %v1655
        %v1686 = vsub.f32 %v852, %v1640
        %v1687 = vsub.f32 %v853, %v1655
        %v1688 = vmul.f32 %v1656, 1.442695
        %v1689 = vpow.pop %v1688
        %v1690 = vmul.f32 %v1657, 1.442695
        %v1691 = vpow.pop %v1690
        %v1692 = vmul.f32 %v1658, 1.442695
        %v1693 = vpow.pop %v1692
        %v1694 = vmul.f32 %v1659, 1.442695
        %v1695 = vpow.pop %v1694
        %v1696 = vmul.f32 %v1660, 1.442695
        %v1697 = vpow.pop %v1696
        %v1698 = vmul.f32 %v1661, 1.442695
        %v1699 = vpow.pop %v1698
        %v1700 = vmul.f32 %v1662, 1.442695
        %v1701 = vpow.pop %v1700
        %v1702 = vmul.f32 %v1663, 1.442695
        %v1703 = vpow.pop %v1702
        %v1704 = vmul.f32 %v1664, 1.442695
        %v1705 = vpow.pop %v1704
        %v1706 = vmul.f32 %v1665, 1.442695
        %v1707 = vpow.pop %v1706
        %v1708 = vmul.f32 %v1666, 1.442695
        %v1709 = vpow.pop %v1708
        %v1710 = vmul.f32 %v1667, 1.442695
        %v1711 = vpow.pop %v1710
        %v1712 = vmul.f32 %v1668, 1.442695
        %v1713 = vpow.pop %v1712
        %v1714 = vmul.f32 %v1669, 1.442695
        %v1715 = vpow.pop %v1714
        %v1716 = vmul.f32 %v1670, 1.442695
        %v1717 = vpow.pop %v1716
        %v1718 = vmul.f32 %v1671, 1.442695
        %v1719 = vpow.pop %v1718
        %v1720 = vmul.f32 %v1672, 1.442695
        %v1721 = vpow.pop %v1720
        %v1722 = vmul.f32 %v1673, 1.442695
        %v1723 = vpow.pop %v1722
        %v1724 = vmul.f32 %v1674, 1.442695
        %v1725 = vpow.pop %v1724
        %v1726 = vmul.f32 %v1675, 1.442695
        %v1727 = vpow.pop %v1726
        %v1728 = vmul.f32 %v1676, 1.442695
        %v1729 = vpow.pop %v1728
        %v1730 = vmul.f32 %v1677, 1.442695
        %v1731 = vpow.pop %v1730
        %v1732 = vmul.f32 %v1678, 1.442695
        %v1733 = vpow.pop %v1732
        %v1734 = vmul.f32 %v1679, 1.442695
        %v1735 = vpow.pop %v1734
        %v1736 = vmul.f32 %v1680, 1.442695
        %v1737 = vpow.pop %v1736
        %v1738 = vmul.f32 %v1681, 1.442695
        %v1739 = vpow.pop %v1738
        %v1740 = vmul.f32 %v1682, 1.442695
        %v1741 = vpow.pop %v1740
        %v1742 = vmul.f32 %v1683, 1.442695
        %v1743 = vpow.pop %v1742
        %v1744 = vmul.f32 %v1684, 1.442695
        %v1745 = vpow.pop %v1744
        %v1746 = vmul.f32 %v1685, 1.442695
        %v1747 = vpow.pop %v1746
        %v1748 = vmul.f32 %v1686, 1.442695
        %v1749 = vpow.pop %v1748
        %v1750 = vmul.f32 %v1687, 1.442695
        %v1751 = vpow.pop %v1750
        %v1752 = vadd.f32 %v1689, %v1693
        %v1753 = vadd.f32 %v1752, %v1697
        %v1754 = vadd.f32 %v1753, %v1701
        %v1755 = vadd.f32 %v1754, %v1705
        %v1756 = vadd.f32 %v1755, %v1709
        %v1757 = vadd.f32 %v1756, %v1713
        %v1758 = vadd.f32 %v1757, %v1717
        %v1759 = vadd.f32 %v1758, %v1721
        %v1760 = vadd.f32 %v1759, %v1725
        %v1761 = vadd.f32 %v1760, %v1729
        %v1762 = vadd.f32 %v1761, %v1733
        %v1763 = vadd.f32 %v1762, %v1737
        %v1764 = vadd.f32 %v1763, %v1741
        %v1765 = vadd.f32 %v1764, %v1745
        %v1766 = vadd.f32 %v1765, %v1749
        %v1767 = vadd.f32 %v1691, %v1695
        %v1768 = vadd.f32 %v1767, %v1699
        %v1769 = vadd.f32 %v1768, %v1703
        %v1770 = vadd.f32 %v1769, %v1707
        %v1771 = vadd.f32 %v1770, %v1711
        %v1772 = vadd.f32 %v1771, %v1715
        %v1773 = vadd.f32 %v1772, %v1719
        %v1774 = vadd.f32 %v1773, %v1723
        %v1775 = vadd.f32 %v1774, %v1727
        %v1776 = vadd.f32 %v1775, %v1731
        %v1777 = vadd.f32 %v1776, %v1735
        %v1778 = vadd.f32 %v1777, %v1739
        %v1779 = vadd.f32 %v1778, %v1743
        %v1780 = vadd.f32 %v1779, %v1747
        %v1781 = vadd.f32 %v1780, %v1751
        %v1782 = vlog2.pop %v1766
        %v1783 = vmul.f32 %v1782, 0.6931472
        %v1784 = vlog2.pop %v1781
        %v1785 = vmul.f32 %v1784, 0.6931472
        %v1786 = vadd.f32 %v1783, %v1640
        %v1787 = vadd.f32 %v1785, %v1655
        %v1788 = vsub.f32 %v886, %v1624
        %v1789 = vsub.f32 %v886, %v1625
        %v1790 = vsub.f32 %v887, %v1624
        %v1791 = vsub.f32 %v887, %v1625
        %v1792 = vsub.f32 %v888, %v1624
        %v1793 = vsub.f32 %v888, %v1625
        %v1794 = vsub.f32 %v889, %v1624
        %v1795 = vsub.f32 %v889, %v1625
        %v1796 = vsub.f32 %v890, %v1624
        %v1797 = vsub.f32 %v890, %v1625
        %v1798 = vsub.f32 %v891, %v1624
        %v1799 = vsub.f32 %v891, %v1625
        %v1800 = vsub.f32 %v892, %v1624
        %v1801 = vsub.f32 %v892, %v1625
        %v1802 = vsub.f32 %v893, %v1624
        %v1803 = vsub.f32 %v893, %v1625
        %v1804 = vsub.f32 %v894, %v1624
        %v1805 = vsub.f32 %v894, %v1625
        %v1806 = vsub.f32 %v895, %v1624
        %v1807 = vsub.f32 %v895, %v1625
        %v1808 = vsub.f32 %v896, %v1624
        %v1809 = vsub.f32 %v896, %v1625
        %v1810 = vsub.f32 %v897, %v1624
        %v1811 = vsub.f32 %v897, %v1625
        %v1812 = vsub.f32 %v898, %v1624
        %v1813 = vsub.f32 %v898, %v1625
        %v1814 = vsub.f32 %v899, %v1624
        %v1815 = vsub.f32 %v899, %v1625
        %v1816 = vsub.f32 %v900, %v1624
        %v1817 = vsub.f32 %v900, %v1625
        %v1818 = vsub.f32 %v901, %v1624
        %v1819 = vsub.f32 %v901, %v1625
        %v1820 = vand.u32 2147483647, %v1788
        %v1821 = vand.u32 2147483647, %v1789
        %v1822 = vand.u32 2147483647, %v1790
        %v1823 = vand.u32 2147483647, %v1791
        %v1824 = vand.u32 2147483647, %v1792
        %v1825 = vand.u32 2147483647, %v1793
        %v1826 = vand.u32 2147483647, %v1794
        %v1827 = vand.u32 2147483647, %v1795
        %v1828 = vand.u32 2147483647, %v1796
        %v1829 = vand.u32 2147483647, %v1797
        %v1830 = vand.u32 2147483647, %v1798
        %v1831 = vand.u32 2147483647, %v1799
        %v1832 = vand.u32 2147483647, %v1800
        %v1833 = vand.u32 2147483647, %v1801
        %v1834 = vand.u32 2147483647, %v1802
        %v1835 = vand.u32 2147483647, %v1803
        %v1836 = vand.u32 2147483647, %v1804
        %v1837 = vand.u32 2147483647, %v1805
        %v1838 = vand.u32 2147483647, %v1806
        %v1839 = vand.u32 2147483647, %v1807
        %v1840 = vand.u32 2147483647, %v1808
        %v1841 = vand.u32 2147483647, %v1809
        %v1842 = vand.u32 2147483647, %v1810
        %v1843 = vand.u32 2147483647, %v1811
        %v1844 = vand.u32 2147483647, %v1812
        %v1845 = vand.u32 2147483647, %v1813
        %v1846 = vand.u32 2147483647, %v1814
        %v1847 = vand.u32 2147483647, %v1815
        %v1848 = vand.u32 2147483647, %v1816
        %v1849 = vand.u32 2147483647, %v1817
        %v1850 = vand.u32 2147483647, %v1818
        %v1851 = vand.u32 2147483647, %v1819
        %v1852 = vsub.f32 1.0, %v1820
        %v1853 = vsub.f32 1.0, %v1821
        %v1854 = vsub.f32 1.0, %v1822
        %v1855 = vsub.f32 1.0, %v1823
        %v1856 = vsub.f32 1.0, %v1824
        %v1857 = vsub.f32 1.0, %v1825
        %v1858 = vsub.f32 1.0, %v1826
        %v1859 = vsub.f32 1.0, %v1827
        %v1860 = vsub.f32 1.0, %v1828
        %v1861 = vsub.f32 1.0, %v1829
        %v1862 = vsub.f32 1.0, %v1830
        %v1863 = vsub.f32 1.0, %v1831
        %v1864 = vsub.f32 1.0, %v1832
        %v1865 = vsub.f32 1.0, %v1833
        %v1866 = vsub.f32 1.0, %v1834
        %v1867 = vsub.f32 1.0, %v1835
        %v1868 = vsub.f32 1.0, %v1836
        %v1869 = vsub.f32 1.0, %v1837
        %v1870 = vsub.f32 1.0, %v1838
        %v1871 = vsub.f32 1.0, %v1839
        %v1872 = vsub.f32 1.0, %v1840
        %v1873 = vsub.f32 1.0, %v1841
        %v1874 = vsub.f32 1.0, %v1842
        %v1875 = vsub.f32 1.0, %v1843
        %v1876 = vsub.f32 1.0, %v1844
        %v1877 = vsub.f32 1.0, %v1845
        %v1878 = vsub.f32 1.0, %v1846
        %v1879 = vsub.f32 1.0, %v1847
        %v1880 = vsub.f32 1.0, %v1848
        %v1881 = vsub.f32 1.0, %v1849
        %v1882 = vsub.f32 1.0, %v1850
        %v1883 = vsub.f32 1.0, %v1851
        %v1884 = vmax.f32 %v1852, 0.0
        %v1885 = vmax.f32 %v1853, 0.0
        %v1886 = vmax.f32 %v1854, 0.0
        %v1887 = vmax.f32 %v1855, 0.0
        %v1888 = vmax.f32 %v1856, 0.0
        %v1889 = vmax.f32 %v1857, 0.0
        %v1890 = vmax.f32 %v1858, 0.0
        %v1891 = vmax.f32 %v1859, 0.0
        %v1892 = vmax.f32 %v1860, 0.0
        %v1893 = vmax.f32 %v1861, 0.0
        %v1894 = vmax.f32 %v1862, 0.0
        %v1895 = vmax.f32 %v1863, 0.0
        %v1896 = vmax.f32 %v1864, 0.0
        %v1897 = vmax.f32 %v1865, 0.0
        %v1898 = vmax.f32 %v1866, 0.0
        %v1899 = vmax.f32 %v1867, 0.0
        %v1900 = vmax.f32 %v1868, 0.0
        %v1901 = vmax.f32 %v1869, 0.0
        %v1902 = vmax.f32 %v1870, 0.0
        %v1903 = vmax.f32 %v1871, 0.0
        %v1904 = vmax.f32 %v1872, 0.0
        %v1905 = vmax.f32 %v1873, 0.0
        %v1906 = vmax.f32 %v1874, 0.0
        %v1907 = vmax.f32 %v1875, 0.0
        %v1908 = vmax.f32 %v1876, 0.0
        %v1909 = vmax.f32 %v1877, 0.0
        %v1910 = vmax.f32 %v1878, 0.0
        %v1911 = vmax.f32 %v1879, 0.0
        %v1912 = vmax.f32 %v1880, 0.0
        %v1913 = vmax.f32 %v1881, 0.0
        %v1914 = vmax.f32 %v1882, 0.0
        %v1915 = vmax.f32 %v1883, 0.0
        %v1916 = vmul.f32 %v1884, %v822
        %v1917 = vmul.f32 %v1885, %v823
        %v1918 = vmul.f32 %v1886, %v824
        %v1919 = vmul.f32 %v1887, %v825
        %v1920 = vmul.f32 %v1888, %v826
        %v1921 = vmul.f32 %v1889, %v827
        %v1922 = vmul.f32 %v1890, %v828
        %v1923 = vmul.f32 %v1891, %v829
        %v1924 = vmul.f32 %v1892, %v830
        %v1925 = vmul.f32 %v1893, %v831
        %v1926 = vmul.f32 %v1894, %v832
        %v1927 = vmul.f32 %v1895, %v833
        %v1928 = vmul.f32 %v1896, %v834
        %v1929 = vmul.f32 %v1897, %v835
        %v1930 = vmul.f32 %v1898, %v836
        %v1931 = vmul.f32 %v1899, %v837
        %v1932 = vmul.f32 %v1900, %v838
        %v1933 = vmul.f32 %v1901, %v839
        %v1934 = vmul.f32 %v1902, %v840
        %v1935 = vmul.f32 %v1903, %v841
        %v1936 = vmul.f32 %v1904, %v842
        %v1937 = vmul.f32 %v1905, %v843
        %v1938 = vmul.f32 %v1906, %v844
        %v1939 = vmul.f32 %v1907, %v845
        %v1940 = vmul.f32 %v1908, %v846
        %v1941 = vmul.f32 %v1909, %v847
        %v1942 = vmul.f32 %v1910, %v848
        %v1943 = vmul.f32 %v1911, %v849
        %v1944 = vmul.f32 %v1912, %v850
        %v1945 = vmul.f32 %v1913, %v851
        %v1946 = vmul.f32 %v1914, %v852
        %v1947 = vmul.f32 %v1915, %v853
        %v1948 = vadd.f32 %v1916, %v1918
        %v1949 = vadd.f32 %v1948, %v1920
        %v1950 = vadd.f32 %v1949, %v1922
        %v1951 = vadd.f32 %v1950, %v1924
        %v1952 = vadd.f32 %v1951, %v1926
        %v1953 = vadd.f32 %v1952, %v1928
        %v1954 = vadd.f32 %v1953, %v1930
        %v1955 = vadd.f32 %v1954, %v1932
        %v1956 = vadd.f32 %v1955, %v1934
        %v1957 = vadd.f32 %v1956, %v1936
        %v1958 = vadd.f32 %v1957, %v1938
        %v1959 = vadd.f32 %v1958, %v1940
        %v1960 = vadd.f32 %v1959, %v1942
        %v1961 = vadd.f32 %v1960, %v1944
        %v1962 = vadd.f32 %v1961, %v1946
        %v1963 = vadd.f32 %v1917, %v1919
        %v1964 = vadd.f32 %v1963, %v1921
        %v1965 = vadd.f32 %v1964, %v1923
        %v1966 = vadd.f32 %v1965, %v1925
        %v1967 = vadd.f32 %v1966, %v1927
        %v1968 = vadd.f32 %v1967, %v1929
        %v1969 = vadd.f32 %v1968, %v1931
        %v1970 = vadd.f32 %v1969, %v1933
        %v1971 = vadd.f32 %v1970, %v1935
        %v1972 = vadd.f32 %v1971, %v1937
        %v1973 = vadd.f32 %v1972, %v1939
        %v1974 = vadd.f32 %v1973, %v1941
        %v1975 = vadd.f32 %v1974, %v1943
        %v1976 = vadd.f32 %v1975, %v1945
        %v1977 = vadd.f32 %v1976, %v1947
        %v1978 = vsub.f32 %v1786, %v1962
        %v1979 = vsub.f32 %v1787, %v1977
        %v1980 = vadd.f32 %v1620, %v1978
        %v1981 = vadd.f32 %v1621, %v1979
        %v1982 = vmax.f32 %v756, 0.0
        %v1983 = vmax.f32 %v757, 0.0
        %v1984 = vmin.f32 %v1982, 14.99
        %v1985 = vmin.f32 %v1983, 14.99
        %v1986 = vmax.f32 %v854, %v858
        %v1987 = vmax.f32 %v856, %v860
        %v1988 = vmax.f32 %v1986, %v862
        %v1989 = vmax.f32 %v1987, %v864
        %v1990 = vmax.f32 %v1988, %v866
        %v1991 = vmax.f32 %v1989, %v868
        %v1992 = vmax.f32 %v1990, %v870
        %v1993 = vmax.f32 %v1991, %v872
        %v1994 = vmax.f32 %v1992, %v874
        %v1995 = vmax.f32 %v1993, %v876
        %v1996 = vmax.f32 %v1994, %v878
        %v1997 = vmax.f32 %v1995, %v880
        %v1998 = vmax.f32 %v1996, %v882
        %v1999 = vmax.f32 %v1997, %v884
        %v2000 = vmax.f32 %v1998, %v1999
        %v2001 = vmax.f32 %v855, %v859
        %v2002 = vmax.f32 %v857, %v861
        %v2003 = vmax.f32 %v2001, %v863
        %v2004 = vmax.f32 %v2002, %v865
        %v2005 = vmax.f32 %v2003, %v867
        %v2006 = vmax.f32 %v2004, %v869
        %v2007 = vmax.f32 %v2005, %v871
        %v2008 = vmax.f32 %v2006, %v873
        %v2009 = vmax.f32 %v2007, %v875
        %v2010 = vmax.f32 %v2008, %v877
        %v2011 = vmax.f32 %v2009, %v879
        %v2012 = vmax.f32 %v2010, %v881
        %v2013 = vmax.f32 %v2011, %v883
        %v2014 = vmax.f32 %v2012, %v885
        %v2015 = vmax.f32 %v2013, %v2014
        %v2016 = vsub.f32 %v854, %v2000
        %v2017 = vsub.f32 %v855, %v2015
        %v2018 = vsub.f32 %v856, %v2000
        %v2019 = vsub.f32 %v857, %v2015
        %v2020 = vsub.f32 %v858, %v2000
        %v2021 = vsub.f32 %v859, %v2015
        %v2022 = vsub.f32 %v860, %v2000
        %v2023 = vsub.f32 %v861, %v2015
        %v2024 = vsub.f32 %v862, %v2000
        %v2025 = vsub.f32 %v863, %v2015
        %v2026 = vsub.f32 %v864, %v2000
        %v2027 = vsub.f32 %v865, %v2015
        %v2028 = vsub.f32 %v866, %v2000
        %v2029 = vsub.f32 %v867, %v2015
        %v2030 = vsub.f32 %v868, %v2000
        %v2031 = vsub.f32 %v869, %v2015
        %v2032 = vsub.f32 %v870, %v2000
        %v2033 = vsub.f32 %v871, %v2015
        %v2034 = vsub.f32 %v872, %v2000
        %v2035 = vsub.f32 %v873, %v2015
        %v2036 = vsub.f32 %v874, %v2000
        %v2037 = vsub.f32 %v875, %v2015
        %v2038 = vsub.f32 %v876, %v2000
        %v2039 = vsub.f32 %v877, %v2015
        %v2040 = vsub.f32 %v878, %v2000
        %v2041 = vsub.f32 %v879, %v2015
        %v2042 = vsub.f32 %v880, %v2000
        %v2043 = vsub.f32 %v881, %v2015
        %v2044 = vsub.f32 %v882, %v2000
        %v2045 = vsub.f32 %v883, %v2015
        %v2046 = vsub.f32 %v884, %v2000
        %v2047 = vsub.f32 %v885, %v2015
        %v2048 = vmul.f32 %v2016, 1.442695
        %v2049 = vpow.pop %v2048
        %v2050 = vmul.f32 %v2017, 1.442695
        %v2051 = vpow.pop %v2050
        %v2052 = vmul.f32 %v2018, 1.442695
        %v2053 = vpow.pop %v2052
        %v2054 = vmul.f32 %v2019, 1.442695
        %v2055 = vpow.pop %v2054
        %v2056 = vmul.f32 %v2020, 1.442695
        %v2057 = vpow.pop %v2056
        %v2058 = vmul.f32 %v2021, 1.442695
        %v2059 = vpow.pop %v2058
        %v2060 = vmul.f32 %v2022, 1.442695
        %v2061 = vpow.pop %v2060
        %v2062 = vmul.f32 %v2023, 1.442695
        %v2063 = vpow.pop %v2062
        %v2064 = vmul.f32 %v2024, 1.442695
        %v2065 = vpow.pop %v2064
        %v2066 = vmul.f32 %v2025, 1.442695
        %v2067 = vpow.pop %v2066
        %v2068 = vmul.f32 %v2026, 1.442695
        %v2069 = vpow.pop %v2068
        %v2070 = vmul.f32 %v2027, 1.442695
        %v2071 = vpow.pop %v2070
        %v2072 = vmul.f32 %v2028, 1.442695
        %v2073 = vpow.pop %v2072
        %v2074 = vmul.f32 %v2029, 1.442695
        %v2075 = vpow.pop %v2074
        %v2076 = vmul.f32 %v2030, 1.442695
        %v2077 = vpow.pop %v2076
        %v2078 = vmul.f32 %v2031, 1.442695
        %v2079 = vpow.pop %v2078
        %v2080 = vmul.f32 %v2032, 1.442695
        %v2081 = vpow.pop %v2080
        %v2082 = vmul.f32 %v2033, 1.442695
        %v2083 = vpow.pop %v2082
        %v2084 = vmul.f32 %v2034, 1.442695
        %v2085 = vpow.pop %v2084
        %v2086 = vmul.f32 %v2035, 1.442695
        %v2087 = vpow.pop %v2086
        %v2088 = vmul.f32 %v2036, 1.442695
        %v2089 = vpow.pop %v2088
        %v2090 = vmul.f32 %v2037, 1.442695
        %v2091 = vpow.pop %v2090
        %v2092 = vmul.f32 %v2038, 1.442695
        %v2093 = vpow.pop %v2092
        %v2094 = vmul.f32 %v2039, 1.442695
        %v2095 = vpow.pop %v2094
        %v2096 = vmul.f32 %v2040, 1.442695
        %v2097 = vpow.pop %v2096
        %v2098 = vmul.f32 %v2041, 1.442695
        %v2099 = vpow.pop %v2098
        %v2100 = vmul.f32 %v2042, 1.442695
        %v2101 = vpow.pop %v2100
        %v2102 = vmul.f32 %v2043, 1.442695
        %v2103 = vpow.pop %v2102
        %v2104 = vmul.f32 %v2044, 1.442695
        %v2105 = vpow.pop %v2104
        %v2106 = vmul.f32 %v2045, 1.442695
        %v2107 = vpow.pop %v2106
        %v2108 = vmul.f32 %v2046, 1.442695
        %v2109 = vpow.pop %v2108
        %v2110 = vmul.f32 %v2047, 1.442695
        %v2111 = vpow.pop %v2110
        %v2112 = vadd.f32 %v2049, %v2053
        %v2113 = vadd.f32 %v2112, %v2057
        %v2114 = vadd.f32 %v2113, %v2061
        %v2115 = vadd.f32 %v2114, %v2065
        %v2116 = vadd.f32 %v2115, %v2069
        %v2117 = vadd.f32 %v2116, %v2073
        %v2118 = vadd.f32 %v2117, %v2077
        %v2119 = vadd.f32 %v2118, %v2081
        %v2120 = vadd.f32 %v2119, %v2085
        %v2121 = vadd.f32 %v2120, %v2089
        %v2122 = vadd.f32 %v2121, %v2093
        %v2123 = vadd.f32 %v2122, %v2097
        %v2124 = vadd.f32 %v2123, %v2101
        %v2125 = vadd.f32 %v2124, %v2105
        %v2126 = vadd.f32 %v2125, %v2109
        %v2127 = vadd.f32 %v2051, %v2055
        %v2128 = vadd.f32 %v2127, %v2059
        %v2129 = vadd.f32 %v2128, %v2063
        %v2130 = vadd.f32 %v2129, %v2067
        %v2131 = vadd.f32 %v2130, %v2071
        %v2132 = vadd.f32 %v2131, %v2075
        %v2133 = vadd.f32 %v2132, %v2079
        %v2134 = vadd.f32 %v2133, %v2083
        %v2135 = vadd.f32 %v2134, %v2087
        %v2136 = vadd.f32 %v2135, %v2091
        %v2137 = vadd.f32 %v2136, %v2095
        %v2138 = vadd.f32 %v2137, %v2099
        %v2139 = vadd.f32 %v2138, %v2103
        %v2140 = vadd.f32 %v2139, %v2107
        %v2141 = vadd.f32 %v2140, %v2111
        %v2142 = vlog2.pop %v2126
        %v2143 = vmul.f32 %v2142, 0.6931472
        %v2144 = vlog2.pop %v2141
        %v2145 = vmul.f32 %v2144, 0.6931472
        %v2146 = vadd.f32 %v2143, %v2000
        %v2147 = vadd.f32 %v2145, %v2015
        %v2148 = vsub.f32 %v886, %v1984
        %v2149 = vsub.f32 %v886, %v1985
        %v2150 = vsub.f32 %v887, %v1984
        %v2151 = vsub.f32 %v887, %v1985
        %v2152 = vsub.f32 %v888, %v1984
        %v2153 = vsub.f32 %v888, %v1985
        %v2154 = vsub.f32 %v889, %v1984
        %v2155 = vsub.f32 %v889, %v1985
        %v2156 = vsub.f32 %v890, %v1984
        %v2157 = vsub.f32 %v890, %v1985
        %v2158 = vsub.f32 %v891, %v1984
        %v2159 = vsub.f32 %v891, %v1985
        %v2160 = vsub.f32 %v892, %v1984
        %v2161 = vsub.f32 %v892, %v1985
        %v2162 = vsub.f32 %v893, %v1984
        %v2163 = vsub.f32 %v893, %v1985
        %v2164 = vsub.f32 %v894, %v1984
        %v2165 = vsub.f32 %v894, %v1985
        %v2166 = vsub.f32 %v895, %v1984
        %v2167 = vsub.f32 %v895, %v1985
        %v2168 = vsub.f32 %v896, %v1984
        %v2169 = vsub.f32 %v896, %v1985
        %v2170 = vsub.f32 %v897, %v1984
        %v2171 = vsub.f32 %v897, %v1985
        %v2172 = vsub.f32 %v898, %v1984
        %v2173 = vsub.f32 %v898, %v1985
        %v2174 = vsub.f32 %v899, %v1984
        %v2175 = vsub.f32 %v899, %v1985
        %v2176 = vsub.f32 %v900, %v1984
        %v2177 = vsub.f32 %v900, %v1985
        %v2178 = vsub.f32 %v901, %v1984
        %v2179 = vsub.f32 %v901, %v1985
        %v2180 = vand.u32 2147483647, %v2148
        %v2181 = vand.u32 2147483647, %v2149
        %v2182 = vand.u32 2147483647, %v2150
        %v2183 = vand.u32 2147483647, %v2151
        %v2184 = vand.u32 2147483647, %v2152
        %v2185 = vand.u32 2147483647, %v2153
        %v2186 = vand.u32 2147483647, %v2154
        %v2187 = vand.u32 2147483647, %v2155
        %v2188 = vand.u32 2147483647, %v2156
        %v2189 = vand.u32 2147483647, %v2157
        %v2190 = vand.u32 2147483647, %v2158
        %v2191 = vand.u32 2147483647, %v2159
        %v2192 = vand.u32 2147483647, %v2160
        %v2193 = vand.u32 2147483647, %v2161
        %v2194 = vand.u32 2147483647, %v2162
        %v2195 = vand.u32 2147483647, %v2163
        %v2196 = vand.u32 2147483647, %v2164
        %v2197 = vand.u32 2147483647, %v2165
        %v2198 = vand.u32 2147483647, %v2166
        %v2199 = vand.u32 2147483647, %v2167
        %v2200 = vand.u32 2147483647, %v2168
        %v2201 = vand.u32 2147483647, %v2169
        %v2202 = vand.u32 2147483647, %v2170
        %v2203 = vand.u32 2147483647, %v2171
        %v2204 = vand.u32 2147483647, %v2172
        %v2205 = vand.u32 2147483647, %v2173
        %v2206 = vand.u32 2147483647, %v2174
        %v2207 = vand.u32 2147483647, %v2175
        %v2208 = vand.u32 2147483647, %v2176
        %v2209 = vand.u32 2147483647, %v2177
        %v2210 = vand.u32 2147483647, %v2178
        %v2211 = vand.u32 2147483647, %v2179
        %v2212 = vsub.f32 1.0, %v2180
        %v2213 = vsub.f32 1.0, %v2181
        %v2214 = vsub.f32 1.0, %v2182
        %v2215 = vsub.f32 1.0, %v2183
        %v2216 = vsub.f32 1.0, %v2184
        %v2217 = vsub.f32 1.0, %v2185
        %v2218 = vsub.f32 1.0, %v2186
        %v2219 = vsub.f32 1.0, %v2187
        %v2220 = vsub.f32 1.0, %v2188
        %v2221 = vsub.f32 1.0, %v2189
        %v2222 = vsub.f32 1.0, %v2190
        %v2223 = vsub.f32 1.0, %v2191
        %v2224 = vsub.f32 1.0, %v2192
        %v2225 = vsub.f32 1.0, %v2193
        %v2226 = vsub.f32 1.0, %v2194
        %v2227 = vsub.f32 1.0, %v2195
        %v2228 = vsub.f32 1.0, %v2196
        %v2229 = vsub.f32 1.0, %v2197
        %v2230 = vsub.f32 1.0, %v2198
        %v2231 = vsub.f32 1.0, %v2199
        %v2232 = vsub.f32 1.0, %v2200
        %v2233 = vsub.f32 1.0, %v2201
        %v2234 = vsub.f32 1.0, %v2202
        %v2235 = vsub.f32 1.0, %v2203
        %v2236 = vsub.f32 1.0, %v2204
        %v2237 = vsub.f32 1.0, %v2205
        %v2238 = vsub.f32 1.0, %v2206
        %v2239 = vsub.f32 1.0, %v2207
        %v2240 = vsub.f32 1.0, %v2208
        %v2241 = vsub.f32 1.0, %v2209
        %v2242 = vsub.f32 1.0, %v2210
        %v2243 = vsub.f32 1.0, %v2211
        %v2244 = vmax.f32 %v2212, 0.0
        %v2245 = vmax.f32 %v2213, 0.0
        %v2246 = vmax.f32 %v2214, 0.0
        %v2247 = vmax.f32 %v2215, 0.0
        %v2248 = vmax.f32 %v2216, 0.0
        %v2249 = vmax.f32 %v2217, 0.0
        %v2250 = vmax.f32 %v2218, 0.0
        %v2251 = vmax.f32 %v2219, 0.0
        %v2252 = vmax.f32 %v2220, 0.0
        %v2253 = vmax.f32 %v2221, 0.0
        %v2254 = vmax.f32 %v2222, 0.0
        %v2255 = vmax.f32 %v2223, 0.0
        %v2256 = vmax.f32 %v2224, 0.0
        %v2257 = vmax.f32 %v2225, 0.0
        %v2258 = vmax.f32 %v2226, 0.0
        %v2259 = vmax.f32 %v2227, 0.0
        %v2260 = vmax.f32 %v2228, 0.0
        %v2261 = vmax.f32 %v2229, 0.0
        %v2262 = vmax.f32 %v2230, 0.0
        %v2263 = vmax.f32 %v2231, 0.0
        %v2264 = vmax.f32 %v2232, 0.0
        %v2265 = vmax.f32 %v2233, 0.0
        %v2266 = vmax.f32 %v2234, 0.0
        %v2267 = vmax.f32 %v2235, 0.0
        %v2268 = vmax.f32 %v2236, 0.0
        %v2269 = vmax.f32 %v2237, 0.0
        %v2270 = vmax.f32 %v2238, 0.0
        %v2271 = vmax.f32 %v2239, 0.0
        %v2272 = vmax.f32 %v2240, 0.0
        %v2273 = vmax.f32 %v2241, 0.0
        %v2274 = vmax.f32 %v2242, 0.0
        %v2275 = vmax.f32 %v2243, 0.0
        %v2276 = vmul.f32 %v2244, %v854
        %v2277 = vmul.f32 %v2245, %v855
        %v2278 = vmul.f32 %v2246, %v856
        %v2279 = vmul.f32 %v2247, %v857
        %v2280 = vmul.f32 %v2248, %v858
        %v2281 = vmul.f32 %v2249, %v859
        %v2282 = vmul.f32 %v2250, %v860
        %v2283 = vmul.f32 %v2251, %v861
        %v2284 = vmul.f32 %v2252, %v862
        %v2285 = vmul.f32 %v2253, %v863
        %v2286 = vmul.f32 %v2254, %v864
        %v2287 = vmul.f32 %v2255, %v865
        %v2288 = vmul.f32 %v2256, %v866
        %v2289 = vmul.f32 %v2257, %v867
        %v2290 = vmul.f32 %v2258, %v868
        %v2291 = vmul.f32 %v2259, %v869
        %v2292 = vmul.f32 %v2260, %v870
        %v2293 = vmul.f32 %v2261, %v871
        %v2294 = vmul.f32 %v2262, %v872
        %v2295 = vmul.f32 %v2263, %v873
        %v2296 = vmul.f32 %v2264, %v874
        %v2297 = vmul.f32 %v2265, %v875
        %v2298 = vmul.f32 %v2266, %v876
        %v2299 = vmul.f32 %v2267, %v877
        %v2300 = vmul.f32 %v2268, %v878
        %v2301 = vmul.f32 %v2269, %v879
        %v2302 = vmul.f32 %v2270, %v880
        %v2303 = vmul.f32 %v2271, %v881
        %v2304 = vmul.f32 %v2272, %v882
        %v2305 = vmul.f32 %v2273, %v883
        %v2306 = vmul.f32 %v2274, %v884
        %v2307 = vmul.f32 %v2275, %v885
        %v2308 = vadd.f32 %v2276, %v2278
        %v2309 = vadd.f32 %v2308, %v2280
        %v2310 = vadd.f32 %v2309, %v2282
        %v2311 = vadd.f32 %v2310, %v2284
        %v2312 = vadd.f32 %v2311, %v2286
        %v2313 = vadd.f32 %v2312, %v2288
        %v2314 = vadd.f32 %v2313, %v2290
        %v2315 = vadd.f32 %v2314, %v2292
        %v2316 = vadd.f32 %v2315, %v2294
        %v2317 = vadd.f32 %v2316, %v2296
        %v2318 = vadd.f32 %v2317, %v2298
        %v2319 = vadd.f32 %v2318, %v2300
        %v2320 = vadd.f32 %v2319, %v2302
        %v2321 = vadd.f32 %v2320, %v2304
        %v2322 = vadd.f32 %v2321, %v2306
        %v2323 = vadd.f32 %v2277, %v2279
        %v2324 = vadd.f32 %v2323, %v2281
        %v2325 = vadd.f32 %v2324, %v2283
        %v2326 = vadd.f32 %v2325, %v2285
        %v2327 = vadd.f32 %v2326, %v2287
        %v2328 = vadd.f32 %v2327, %v2289
        %v2329 = vadd.f32 %v2328, %v2291
        %v2330 = vadd.f32 %v2329, %v2293
        %v2331 = vadd.f32 %v2330, %v2295
        %v2332 = vadd.f32 %v2331, %v2297
        %v2333 = vadd.f32 %v2332, %v2299
        %v2334 = vadd.f32 %v2333, %v2301
        %v2335 = vadd.f32 %v2334, %v2303
        %v2336 = vadd.f32 %v2335, %v2305
        %v2337 = vadd.f32 %v2336, %v2307
        %v2338 = vsub.f32 %v2146, %v2322
        %v2339 = vsub.f32 %v2147, %v2337
        %v2340 = vadd.f32 %v1980, %v2338
        %v2341 = vadd.f32 %v1981, %v2339
        %v2342 = vmul.f32 %v2340, 0.25
        %v2343 = vmul.f32 %v2341, 0.25
        %v2344 = vmul.f32 %v2342, %v580
        %v2345 = vmul.f32 %v2343, %v581
        %v2346 = vsel %vm582, %v2344, 0.0
        %v2347 = vsel %vm583, %v2345, 0.0
        %v2348 = vld [vmem:[%s554] sm:$0xff]
        %v2349 = vld [vmem:[%s554 + $0x8] sm:$0xff]
        %v2350 = vadd.f32 %v2348, %v744
        %v2351 = vadd.f32 %v2349, %v745
        %2352 = vst [vmem:[%s554] sm:$0xff] %v2350
        %2353 = vst [vmem:[%s554 + $0x8] sm:$0xff] %v2351
        %v2354 = vld [vmem:[%s561] sm:$0xff]
        %v2355 = vld [vmem:[%s561 + $0x8] sm:$0xff]
        %v2356 = vadd.f32 %v2354, %v2346
        %v2357 = vadd.f32 %v2355, %v2347
        %2358 = vst [vmem:[%s561] sm:$0xff] %v2356
        %2359 = vst [vmem:[%s561 + $0x8] sm:$0xff] %v2357
        %s2360 = sand.u32 %s193, 1
        %s2361 = scalar_lea.sflag [#allocation4], %s2360
        %s2362 = sand.u32 %s193, 1
        %s2363 = smul.addr %s2362, 16
        %s2364 = scalar_lea.vmem [#allocation11], %s2363
        %s2365 = sand.u32 %s219, 1
        %s2366 = scalar_lea.sflag [#allocation13], %s2365
        %s2367 = sand.u32 %s219, 1
        %s2368 = smul.addr %s2367, 16
        %s2369 = scalar_lea.vmem [#allocation12], %s2368
        // Predicated region
        $region65: #{tpu_custom_call.1} parent=39 // pred_check
          %p2370 = pneg %p203
        $region66: #{tpu_custom_call.1} parent=39 // pred_check_branch
          %2372 = sbr.rel (%p2370) target = $region68
        $region67: #{tpu_custom_call.1} parent=39 // pred_region
          %s2374 = ssub.s32 256, 256
          %2375 = vsyncadd %s2361, %s2374
          %s2376 = smul.addr %s37, 2
          %s2377 = smul.addr %s2376, 128
          %s2378 = scalar_lea.hbm %s5, %s2377
          %s2379 = sshll.u32 %s2364, 4
          %s2380 = int_to_ptr.vmem [resolvable:$true] %s2379
          %2385 = dma.vmem_to_hbm [thread:$0]  %s2380, 256, %s2378, %s2361, 128, 128, 8
        $region68: #{tpu_custom_call.1} parent=39 // pred_fallthru
          _
        // Predicated region
        $region69: #{tpu_custom_call.1} parent=39 // pred_check
          %p2386 = pneg %p229
        $region70: #{tpu_custom_call.1} parent=39 // pred_check_branch
          %2388 = sbr.rel (%p2386) target = $region72
        $region71: #{tpu_custom_call.1} parent=39 // pred_region
          %s2390 = ssub.s32 256, 256
          %2391 = vsyncadd %s2366, %s2390
          %s2392 = smul.addr %s37, 2
          %s2393 = smul.addr %s2392, 128
          %s2394 = scalar_lea.hbm %s6, %s2393
          %s2395 = sshll.u32 %s2369, 4
          %s2396 = int_to_ptr.vmem [resolvable:$true] %s2395
          %2401 = dma.vmem_to_hbm [thread:$0]  %s2396, 256, %s2394, %s2366, 128, 128, 8
        $region72: #{tpu_custom_call.1} parent=39 // pred_fallthru
          _
      $region40: #{tpu_custom_call.1} parent=5 // pred_fallthru
        _
      %p2402 = scmp.le.s32.totalorder 2, %s28
      // Predicated region
      $region73: #{tpu_custom_call.1} parent=5 // pred_check
        %p2403 = pneg %p2402
      $region74: #{tpu_custom_call.1} parent=5 // pred_check_branch
        %2405 = sbr.rel (%p2403) target = $region76
      $region75: #{tpu_custom_call.1} parent=5 // pred_region
        %s2406 = ssub.s32 %s28, 2
        // Predicated region
        $region77: #{tpu_custom_call.1} parent=75 // pred_check
          %p2407 = pneg %p209
        $region78: #{tpu_custom_call.1} parent=75 // pred_check_branch
          %2409 = sbr.rel (%p2407) target = $region80
        $region79: #{tpu_custom_call.1} parent=75 // pred_region
          %s2410 = sand.u32 %s194, 1
          %s2411 = scalar_lea.sflag [#allocation4], %s2410
          %s2412 = sand.u32 %s194, 1
          %s2413 = smul.addr %s2412, 16
          %s2414 = scalar_lea.vmem [#allocation11], %s2413
          %2415 = dma.done %s2411, 256
        $region80: #{tpu_custom_call.1} parent=75 // pred_fallthru
          _
        // Predicated region
        $region81: #{tpu_custom_call.1} parent=75 // pred_check
          %p2416 = pneg %p235
        $region82: #{tpu_custom_call.1} parent=75 // pred_check_branch
          %2418 = sbr.rel (%p2416) target = $region84
        $region83: #{tpu_custom_call.1} parent=75 // pred_region
          %s2419 = sand.u32 %s220, 1
          %s2420 = scalar_lea.sflag [#allocation13], %s2419
          %s2421 = sand.u32 %s220, 1
          %s2422 = smul.addr %s2421, 16
          %s2423 = scalar_lea.vmem [#allocation12], %s2422
          %2424 = dma.done %s2420, 256
        $region84: #{tpu_custom_call.1} parent=75 // pred_fallthru
          _
      $region76: #{tpu_custom_call.1} parent=5 // pred_fallthru
        _
    $region6: #{tpu_custom_call.1} parent=1 // loop_footer
      %s32 = sadd.s32 1, %s28
    $region7: #{tpu_custom_call.1} parent=1 // loop_footer_branch
      %27 = sbr.rel target = $region3
    $region8: #{tpu_custom_call.1} parent=1 // loop_exit
      _
    %2425 = vsyncpa [#allocation3], 1
    %s2426 = scalar_lea.sflag [#allocation3], 1
    %2427 = vsyncpa %s2426, 1
    %2428 = vsyncpa [#allocation6], 1
    %s2429 = scalar_lea.sflag [#allocation6], 1
    %2430 = vsyncpa %s2429, 1
    %2431 = vsyncpa [#allocation9], 1
    %s2432 = scalar_lea.sflag [#allocation9], 1
    %2433 = vsyncpa %s2432, 1
    %2434 = vsyncpa [#allocation4], 1
    %s2435 = scalar_lea.sflag [#allocation4], 1
    %2436 = vsyncpa %s2435, 1
    %2437 = vsyncpa [#allocation13], 1
    %s2438 = scalar_lea.sflag [#allocation13], 1
    %2439 = vsyncpa %s2438, 1

</llo_original>
